<compile_context>
chip_gen: v6e
topology: v6e:2x2x1
jax: 0.10.0
libtpu: 0.0.40
codegen_flags: <defaults>
</compile_context>

<pallas_src>
import jax
import jax.numpy as jnp
from jax import lax
from jax.experimental import pallas as pl
from jax.experimental.pallas import tpu as pltpu


# --------------------------------------------------------------------------- #
# Kernels
# --------------------------------------------------------------------------- #
def _row_scale(dinv_rep, x):
    """Per-row scale of x (rows, C) by a lane-replicated (rows, 128) dinv tile."""
    if x.shape[-1] == dinv_rep.shape[-1]:
        return dinv_rep * x                # lane-dense, no relayout (common case C==128)
    return dinv_rep[:, :1] * x             # broadcast from column 0 (C multiple of 128)


def _enc_deg_kernel(adj_ref, feat_ref, w1_ref, s1_ref, t1_ref,
                    w2_ref, s2_ref, t2_ref, gw1_ref,
                    dinv_ref, xw1_ref, deg_ref):
    """Fused: degree accumulation over adjacency column tiles; at k==last the encoder
    chain, the D^-1/2 fold and xw1 = dinv * (encode(x) @ W_gcn1)."""
    k = pl.program_id(1)
    f32 = jnp.float32

    @pl.when(k == 0)
    def _():
        deg_ref[...] = jnp.zeros_like(deg_ref)

    # Row-sum on VPU/XLU (int8 -> f32 upcast rides on slack VALU slots of this
    # adjacency-bandwidth-bound loop; keeps the MXU free, which matters on v5e).
    deg_ref[...] += jnp.sum(adj_ref[...].astype(f32), axis=1, keepdims=True)

    @pl.when(k == pl.num_programs(1) - 1)
    def _():
        deg = deg_ref[...]                                         # (rows, 1)
        dinv = jnp.where(deg > 0.0, lax.rsqrt(deg), 0.0)           # guard isolated nodes
        dinv_ref[...] = jnp.broadcast_to(dinv, dinv_ref.shape)     # lane-replicated store

        h = jnp.dot(feat_ref[...], w1_ref[...], preferred_element_type=f32)
        h = jnp.maximum(h * s1_ref[...] + t1_ref[...], 0.0)        # folded Linear bias + BN (eval)
        # TODO(synk): Dropout(0.2) is identity in eval mode; training-mode mask not implemented.
        e = jnp.dot(h.astype(jnp.bfloat16), w2_ref[...], preferred_element_type=f32)
        e = jnp.maximum(e * s2_ref[...] + t2_ref[...], 0.0)
        xw = jnp.dot(e.astype(jnp.bfloat16), gw1_ref[...], preferred_element_type=f32)
        xw1_ref[...] = (dinv * xw).astype(xw1_ref.dtype)           # fold D^-1/2 column scaling


def _gcn_mid_kernel(adj_ref, xw_ref, dinv_ref, b_ref, nw_ref, out_ref, acc_ref):
    """g1 = relu(dinv * (adj @ xw1) + b1); out = dinv * (g1 @ W_gcn2)  (bf16)."""
    k = pl.program_id(1)

    @pl.when(k == 0)
    def _():
        acc_ref[...] = jnp.zeros_like(acc_ref)

    acc_ref[...] += jnp.dot(adj_ref[...].astype(jnp.bfloat16), xw_ref[...],
                            preferred_element_type=jnp.float32)

    @pl.when(k == pl.num_programs(1) - 1)
    def _():
        dinv = dinv_ref[...]
        g = jnp.maximum(_row_scale(dinv, acc_ref[...]) + b_ref[...], 0.0)
        y = jnp.dot(g.astype(jnp.bfloat16), nw_ref[...], preferred_element_type=jnp.float32)
        out_ref[...] = _row_scale(dinv, y).astype(out_ref.dtype)


def _gcn_final_kernel(adj_ref, xw_ref, dinv_ref, b_ref, cw_ref, cb_ref, out_ref, acc_ref):
    """g2 = relu(dinv * (adj @ xw2) + b2); out = clip(sigmoid(g2 @ W_cls + b_cls))."""
    k = pl.program_id(1)

    @pl.when(k == 0)
    def _():
        acc_ref[...] = jnp.zeros_like(acc_ref)

    acc_ref[...] += jnp.dot(adj_ref[...].astype(jnp.bfloat16), xw_ref[...],
                            preferred_element_type=jnp.float32)

    @pl.when(k == pl.num_programs(1) - 1)
    def _():
        dinv = dinv_ref[...]
        g = jnp.maximum(_row_scale(dinv, acc_ref[...]) + b_ref[...], 0.0)
        logits = jnp.dot(g.astype(jnp.bfloat16), cw_ref[...],
                         preferred_element_type=jnp.float32) + cb_ref[...]
        # sigmoid via EUP exp + approximate EUP reciprocal (no VPU divide)
        probs = pl.reciprocal(1.0 + jnp.exp(-logits), approx=True)
        out_ref[...] = jnp.clip(probs, 1e-10, 1.0 - 1e-10)


# --------------------------------------------------------------------------- #
# One-time (out-of-hot-path) preprocessing
# --------------------------------------------------------------------------- #
def _round_up(x, m):
    return ((x + m - 1) // m) * m


def _pad2(x, rows, cols):
    return jnp.pad(x, ((0, rows - x.shape[0]), (0, cols - x.shape[1])))


def _largest_divisor_block(n_p, target, quantum=128):
    """Largest multiple of `quantum` that divides n_p and is <= max(target, quantum)."""
    limit = min(max(target, quantum), n_p)
    best = quantum
    d = quantum
    while d <= limit:
        if n_p % d == 0:
            best = d
        d += quantum
    return best


def choose_tiles(n, *, row_target=1024, col_target=2048):
    n_p = _round_up(max(int(n), 1), 128)
    # keep >= 2 row blocks whenever the graph allows it, so the 'parallel' row axis
    # feeds both TensorCores on v7x.
    row_cap = row_target if n_p < 256 else min(row_target, n_p // 2)
    block_rows = _largest_divisor_block(n_p, row_cap)
    block_cols = _largest_divisor_block(n_p, col_target)
    return n_p, block_rows, block_cols


def prepare_graph(feature, adj, *, row_target=1024, col_target=2048):
    """Per-graph preprocessing kept OUT of the forward hot path: pad to TPU-friendly
    shapes and quantize the (static) adjacency to int8 = 1 byte/element HBM stream."""
    n, f_in = feature.shape
    n_p, br, bc = choose_tiles(n, row_target=row_target, col_target=col_target)
    f_p = _round_up(f_in, 128)
    feat_p = _pad2(feature, n_p, f_p).astype(jnp.bfloat16)
    # Exact for integer-valued adjacency with |a| <= 127 (0/1 graphs, self-loops, ...).
    # TODO(synk): keep adj in bf16 here for graphs with non-integer edge weights.
    adj_i8 = _pad2(adj, n_p, n_p).astype(jnp.int8)
    meta = dict(n=n, n_p=n_p, block_rows=br, block_cols=bc)
    return feat_p, adj_i8, meta


def prepare_params(params):
    """One-time weight prep: pad to lane multiples, cast MXU operands to bf16."""
    f32, bf16 = jnp.float32, jnp.bfloat16
    f_in = params["enc_w1"].shape[0]
    e_dim = params["enc_w2"].shape[1]
    gh = params["gcn1_w"].shape[1]
    go = params["gcn2_w"].shape[1]
    n_out = params["cls_w"].shape[1]
    f_p = _round_up(f_in, 128)
    e_p = _round_up(e_dim, 128)
    gh_p = _round_up(gh, 128)
    go_p = _round_up(go, 128)
    o_p = _round_up(n_out, 128)
    return dict(
        w1=_pad2(params["enc_w1"], f_p, 512).astype(bf16),
        s1=params["enc_s1"].astype(f32),
        t1=params["enc_t1"].astype(f32),
        w2=_pad2(params["enc_w2"], 512, e_p).astype(bf16),
        s2=_pad2(params["enc_s2"], 1, e_p).astype(f32),
        t2=_pad2(params["enc_t2"], 1, e_p).astype(f32),
        gw1=_pad2(params["gcn1_w"], e_p, gh_p).astype(bf16),
        gb1=_pad2(params["gcn1_b"], 1, gh_p).astype(f32),
        gw2=_pad2(params["gcn2_w"], gh_p, go_p).astype(bf16),
        gb2=_pad2(params["gcn2_b"], 1, go_p).astype(f32),
        cw=_pad2(params["cls_w"], go_p, o_p).astype(bf16),
        cb=_pad2(params["cls_b"], 1, o_p).astype(f32),
        n_out=n_out,
    )


# --------------------------------------------------------------------------- #
# Forward (hot path): expects kernel-ready inputs from prepare_graph/prepare_params
# --------------------------------------------------------------------------- #
def gcn_classifier_forward(feat_p, adj_i8, pp, meta):
    f32, bf16 = jnp.float32, jnp.bfloat16
    n, n_p = meta["n"], meta["n_p"]
    br, bc = meta["block_rows"], meta["block_cols"]
    f_p = feat_p.shape[1]
    e_p = pp["w2"].shape[1]
    gh_p = pp["gw1"].shape[1]
    go_p = pp["gw2"].shape[1]
    o_p = pp["cw"].shape[1]
    n_out = pp["n_out"]

    n_row, n_col = n_p // br, n_p // bc
    cp = pltpu.CompilerParams(
        dimension_semantics=("parallel", "arbitrary"),   # row axis shards across v7x TCs
        vmem_limit_bytes=32 * 1024 * 1024)               # fits v7x's 64 MiB with headroom
    # NOTE: pipeline_mode=pl.Buffered(3) on the streamed adj/xw specs is a further
    # tuning knob (hides the k==last epilogue); left at default double-buffering here.

    # --- 1) fused degree + encoder + pre-scaled (e @ W_gcn1) -----------------
    dinv, xw1 = pl.pallas_call(
        _enc_deg_kernel,
        out_shape=(jax.ShapeDtypeStruct((n_p, 128), f32),
                   jax.ShapeDtypeStruct((n_p, gh_p), bf16)),
        grid_spec=pltpu.PrefetchScalarGridSpec(
            num_scalar_prefetch=0, grid=(n_row, n_col),
            in_specs=[
                pl.BlockSpec((br, bc), lambda i, k: (i, k)),      # adj (int8 stream)
                pl.BlockSpec((br, f_p), lambda i, k: (i, 0)),     # feature rows (resident per i)
                pl.BlockSpec((f_p, 512), lambda i, k: (0, 0)),    # enc W1 (resident)
                pl.BlockSpec((1, 512), lambda i, k: (0, 0)),      # BN1 scale
                pl.BlockSpec((1, 512), lambda i, k: (0, 0)),      # BN1 shift
                pl.BlockSpec((512, e_p), lambda i, k: (0, 0)),    # enc W2 (resident)
                pl.BlockSpec((1, e_p), lambda i, k: (0, 0)),      # BN2 scale
                pl.BlockSpec((1, e_p), lambda i, k: (0, 0)),      # BN2 shift
                pl.BlockSpec((e_p, gh_p), lambda i, k: (0, 0)),   # gcn1 W (resident)
            ],
            out_specs=(pl.BlockSpec((br, 128), lambda i, k: (i, 0)),
                       pl.BlockSpec((br, gh_p), lambda i, k: (i, 0))),
            scratch_shapes=[pltpu.VMEM((br, 1), f32)]),
        compiler_params=cp,
    )(adj_i8, feat_p, pp["w1"], pp["s1"], pp["t1"],
      pp["w2"], pp["s2"], pp["t2"], pp["gw1"])

    # --- 2) gcn1 aggregation + prep for gcn2 ----------------------------------
    xw2 = pl.pallas_call(
        _gcn_mid_kernel,
        out_shape=jax.ShapeDtypeStruct((n_p, go_p), bf16),
        grid_spec=pltpu.PrefetchScalarGridSpec(
            num_scalar_prefetch=0, grid=(n_row, n_col),
            in_specs=[
                pl.BlockSpec((br, bc), lambda i, k: (i, k)),      # adj tile (int8)
                pl.BlockSpec((bc, gh_p), lambda i, k: (k, 0)),    # xw1 K-tile
                pl.BlockSpec((br, 128), lambda i, k: (i, 0)),     # dinv rows (lane-replicated)
                pl.BlockSpec((1, gh_p), lambda i, k: (0, 0)),     # gcn1 bias
                pl.BlockSpec((gh_p, go_p), lambda i, k: (0, 0)),  # gcn2 W (resident)
            ],
            out_specs=pl.BlockSpec((br, go_p), lambda i, k: (i, 0)),
            scratch_shapes=[pltpu.VMEM((br, gh_p), f32)]),
        compiler_params=cp,
    )(adj_i8, xw1, dinv, pp["gb1"], pp["gw2"])

    # --- 3) gcn2 aggregation + classifier head (lane-dense padded output) -----
    probs = pl.pallas_call(
        _gcn_final_kernel,
        out_shape=jax.ShapeDtypeStruct((n_p, o_p), f32),
        grid_spec=pltpu.PrefetchScalarGridSpec(
            num_scalar_prefetch=0, grid=(n_row, n_col),
            in_specs=[
                pl.BlockSpec((br, bc), lambda i, k: (i, k)),      # adj tile (int8)
                pl.BlockSpec((bc, go_p), lambda i, k: (k, 0)),    # xw2 K-tile
                pl.BlockSpec((br, 128), lambda i, k: (i, 0)),     # dinv rows
                pl.BlockSpec((1, go_p), lambda i, k: (0, 0)),     # gcn2 bias
                pl.BlockSpec((go_p, o_p), lambda i, k: (0, 0)),   # cls W (resident)
                pl.BlockSpec((1, o_p), lambda i, k: (0, 0)),      # cls bias
            ],
            out_specs=pl.BlockSpec((br, o_p), lambda i, k: (i, 0)),
            scratch_shapes=[pltpu.VMEM((br, go_p), f32)]),
        compiler_params=cp,
    )(adj_i8, xw2, dinv, pp["gb2"], pp["cw"], pp["cb"])

    return probs[:n, :n_out]


# --------------------------------------------------------------------------- #
# Parameter construction (folds eval-mode BatchNorm1d + Linear bias)
# --------------------------------------------------------------------------- #
def _fold_bn(bias, gamma, beta, mean, var, eps=1e-5):
    scale = gamma / jnp.sqrt(var + eps)
    shift = (bias - mean) * scale + beta
    return scale[None, :], shift[None, :]


def make_params(key, features, embedding_dim, gcn_hidden, gcn_out, out_features):
    ks = jax.random.split(key, 16)
    u = lambda k, shape, s: jax.random.uniform(k, shape, jnp.float32, -s, s)

    # encoder Linear(features, 512) + BN(512)
    w1 = u(ks[0], (features, 512), 1.0 / jnp.sqrt(features))
    b1 = u(ks[1], (512,), 1.0 / jnp.sqrt(features))
    g1 = 1.0 + 0.1 * jax.random.normal(ks[2], (512,), jnp.float32)
    be1 = 0.1 * jax.random.normal(ks[3], (512,), jnp.float32)
    m1 = 0.1 * jax.random.normal(ks[4], (512,), jnp.float32)
    v1 = jax.random.uniform(ks[5], (512,), jnp.float32, 0.5, 1.5)
    s1, t1 = _fold_bn(b1, g1, be1, m1, v1)

    # encoder Linear(512, embedding_dim) + BN(embedding_dim)
    w2 = u(ks[6], (512, embedding_dim), 1.0 / jnp.sqrt(512))
    b2 = u(ks[7], (embedding_dim,), 1.0 / jnp.sqrt(512))
    g2 = 1.0 + 0.1 * jax.random.normal(ks[8], (embedding_dim,), jnp.float32)
    be2 = 0.1 * jax.random.normal(ks[9], (embedding_dim,), jnp.float32)
    m2 = 0.1 * jax.random.normal(ks[10], (embedding_dim,), jnp.float32)
    v2 = jax.random.uniform(ks[11], (embedding_dim,), jnp.float32, 0.5, 1.5)
    s2, t2 = _fold_bn(b2, g2, be2, m2, v2)

    # GCN layers (xavier_uniform-like) + zero bias
    xav = lambda k, fi, fo: jax.random.uniform(
        k, (fi, fo), jnp.float32, -jnp.sqrt(6.0 / (fi + fo)), jnp.sqrt(6.0 / (fi + fo)))
    gcn1_w = xav(ks[12], embedding_dim, gcn_hidden)
    gcn1_b = jnp.zeros((1, gcn_hidden), jnp.float32)
    gcn2_w = xav(ks[13], gcn_hidden, gcn_out)
    gcn2_b = jnp.zeros((1, gcn_out), jnp.float32)

    # classifier Linear(gcn_out, out_features)
    cls_w = u(ks[14], (gcn_out, out_features), 1.0 / jnp.sqrt(gcn_out))
    cls_b = u(ks[15], (out_features,), 1.0 / jnp.sqrt(gcn_out))[None, :]

    return dict(enc_w1=w1, enc_s1=s1, enc_t1=t1,
                enc_w2=w2, enc_s2=s2, enc_t2=t2,
                gcn1_w=gcn1_w, gcn1_b=gcn1_b,
                gcn2_w=gcn2_w, gcn2_b=gcn2_b,
                cls_w=cls_w, cls_b=cls_b)


# --------------------------------------------------------------------------- #
# Pure-JAX references
# --------------------------------------------------------------------------- #
def reference_forward(feature, adj, p, match_kernel_precision=True):
    """Same eval-mode forward. If match_kernel_precision, mirror the kernel's bf16
    matmul-operand casts (f32 accumulation) so only reduction order differs."""
    if match_kernel_precision:
        cast = lambda x: x.astype(jnp.bfloat16)
    else:
        cast = lambda x: x.astype(jnp.float32)
    dot = lambda a, b: jnp.dot(cast(a), cast(b), preferred_element_type=jnp.float32)

    h = jnp.maximum(dot(feature, p["enc_w1"]) * p["enc_s1"] + p["enc_t1"], 0.0)
    e = jnp.maximum(dot(h, p["enc_w2"]) * p["enc_s2"] + p["enc_t2"], 0.0)
    deg = jnp.sum(adj, axis=1, keepdims=True)
    dinv = jnp.where(deg > 0.0, lax.rsqrt(deg), 0.0)
    xw1 = cast(dinv * dot(e, p["gcn1_w"]))                 # kernel stores this in bf16
    g1 = jnp.maximum(dinv * dot(adj, xw1) + p["gcn1_b"], 0.0)
    xw2 = cast(dinv * dot(g1, p["gcn2_w"]))
    g2 = jnp.maximum(dinv * dot(adj, xw2) + p["gcn2_b"], 0.0)
    logits = dot(g2, p["cls_w"]) + p["cls_b"]
    return jnp.clip(jax.nn.sigmoid(logits), 1e-10, 1.0 - 1e-10)


# --------------------------------------------------------------------------- #
# Demo / correctness check
# --------------------------------------------------------------------------- #
if __name__ == "__main__":
    N_NODES = 8
    FEATURES = 64
    EMBED_DIM = 32
    GCN_HIDDEN = 32
    GCN_OUT = 16
    OUT_FEATURES = 4

    key = jax.random.PRNGKey(0)
    k_feat, k_adj, k_par = jax.random.split(key, 3)

    feature = jax.random.normal(k_feat, (N_NODES, FEATURES), jnp.float32)
    # symmetric 0/1 adjacency with self-loops (positive degree guaranteed)
    a = (jax.random.uniform(k_adj, (N_NODES, N_NODES)) < 0.4).astype(jnp.float32)
    adj = jnp.clip(a + a.T, 0.0, 1.0) + jnp.eye(N_NODES, dtype=jnp.float32)

    params = make_params(k_par, FEATURES, EMBED_DIM, GCN_HIDDEN, GCN_OUT, OUT_FEATURES)

    # one-time, out-of-hot-path preprocessing (pad + int8-quantize adj, fold BN, pad weights)
    feat_p, adj_i8, meta = prepare_graph(feature, adj)
    pp = prepare_params(params)

    out = jax.block_until_ready(gcn_classifier_forward(feat_p, adj_i8, pp, meta))
    assert out.shape == (N_NODES, OUT_FEATURES)
    assert bool(jnp.all(jnp.isfinite(out)))

    ref_bf16 = jax.block_until_ready(
        reference_forward(feature, adj, params, match_kernel_precision=True))
    ref_f32 = jax.block_until_ready(
        reference_forward(feature, adj, params, match_kernel_precision=False))
    assert jnp.allclose(out, ref_bf16, atol=1e-2), "mismatch vs bf16-matched reference"
    assert jnp.allclose(out, ref_f32, atol=5e-2), "mismatch vs f32 reference"

    print("KERNEL_OK")
</pallas_src>

<mosaic_0001>
module attributes {stable_mosaic.version = 11 : i64} {
  func.func @_enc_deg_kernel(%arg0: i32, %arg1: i32, %arg2: memref<128x128xi8, #tpu.memory_space<vmem>>, %arg3: memref<128x128xbf16, #tpu.memory_space<vmem>>, %arg4: memref<128x512xbf16, #tpu.memory_space<vmem>>, %arg5: memref<1x512xf32, #tpu.memory_space<vmem>>, %arg6: memref<1x512xf32, #tpu.memory_space<vmem>>, %arg7: memref<512x128xbf16, #tpu.memory_space<vmem>>, %arg8: memref<1x128xf32, #tpu.memory_space<vmem>>, %arg9: memref<1x128xf32, #tpu.memory_space<vmem>>, %arg10: memref<128x128xbf16, #tpu.memory_space<vmem>>, %arg11: memref<128x128xf32, #tpu.memory_space<vmem>>, %arg12: memref<128x128xbf16, #tpu.memory_space<vmem>>, %arg13: memref<128x1xf32, #tpu.memory_space<vmem>>) attributes {dimension_semantics = [#tpu.dimension_semantics<parallel>, #tpu.dimension_semantics<arbitrary>], iteration_bounds = array<i64: 1, 1>, scalar_prefetch = 0 : i64, scratch_operands = 1 : i64, tpu.core_type = #tpu.core_type<tc>, window_params = [{transform_indices = @transform_0, window_bounds = array<i64: 128, 128>}, {transform_indices = @transform_1, window_bounds = array<i64: 128, 128>}, {pipeline_mode = #tpu.pipeline_mode<synchronous>, transform_indices = @transform_2, window_bounds = array<i64: 128, 512>}, {pipeline_mode = #tpu.pipeline_mode<synchronous>, transform_indices = @transform_3, window_bounds = array<i64: 1, 512>}, {pipeline_mode = #tpu.pipeline_mode<synchronous>, transform_indices = @transform_4, window_bounds = array<i64: 1, 512>}, {pipeline_mode = #tpu.pipeline_mode<synchronous>, transform_indices = @transform_5, window_bounds = array<i64: 512, 128>}, {pipeline_mode = #tpu.pipeline_mode<synchronous>, transform_indices = @transform_6, window_bounds = array<i64: 1, 128>}, {pipeline_mode = #tpu.pipeline_mode<synchronous>, transform_indices = @transform_7, window_bounds = array<i64: 1, 128>}, {pipeline_mode = #tpu.pipeline_mode<synchronous>, transform_indices = @transform_8, window_bounds = array<i64: 128, 128>}, {transform_indices = @transform_9, window_bounds = array<i64: 128, 128>}, {transform_indices = @transform_10, window_bounds = array<i64: 128, 128>}]} {
    %c0_i32 = arith.constant 0 : i32
    %0 = arith.cmpi eq, %arg1, %c0_i32 : i32
    %1 = arith.extui %0 : i1 to i32
    %c0_i32_0 = arith.constant 0 : i32
    %2 = arith.cmpi ne, %1, %c0_i32_0 : i32
    scf.if %2 {
      %cst_8 = arith.constant 0.000000e+00 : f32
      %13 = vector.broadcast %cst_8 : f32 to vector<128x1xf32>
      %c0_9 = arith.constant 0 : index
      %c0_10 = arith.constant 0 : index
      %14 = vector.load %arg13[%c0_9, %c0_10] : memref<128x1xf32, #tpu.memory_space<vmem>>, vector<128x1xf32>
      tpu.vector_store %arg13[%c0_9, %c0_10], %13 {strides = array<i32>} : memref<128x1xf32, #tpu.memory_space<vmem>>, vector<128x1xf32>,
    } else {
    }
    %c0 = arith.constant 0 : index
    %c0_1 = arith.constant 0 : index
    %3 = vector.load %arg13[%c0, %c0_1] : memref<128x1xf32, #tpu.memory_space<vmem>>, vector<128x1xf32>
    %c0_2 = arith.constant 0 : index
    %c0_3 = arith.constant 0 : index
    %4 = vector.load %arg2[%c0_2, %c0_3] : memref<128x128xi8, #tpu.memory_space<vmem>>, vector<128x128xi8>
    %5 = arith.sitofp %4 : vector<128x128xi8> to vector<128x128xf32>
    %cst = arith.constant dense<0.000000e+00> : vector<128xf32>
    %6 = vector.multi_reduction <add>, %5, %cst [1] : vector<128x128xf32> to vector<128xf32>
    %7 = vector.shape_cast %6 : vector<128xf32> to vector<128x1xf32>
    %8 = arith.addf %3, %7 : vector<128x1xf32>
    %c0_4 = arith.constant 0 : index
    %c0_5 = arith.constant 0 : index
    %9 = vector.load %arg13[%c0_4, %c0_5] : memref<128x1xf32, #tpu.memory_space<vmem>>, vector<128x1xf32>
    tpu.vector_store %arg13[%c0_4, %c0_5], %8 {strides = array<i32>} : memref<128x1xf32, #tpu.memory_space<vmem>>, vector<128x1xf32>,
    %c0_i32_6 = arith.constant 0 : i32
    %10 = arith.cmpi eq, %arg1, %c0_i32_6 : i32
    %11 = arith.extui %10 : i1 to i32
    %c0_i32_7 = arith.constant 0 : i32
    %12 = arith.cmpi ne, %11, %c0_i32_7 : i32
    scf.if %12 {
      %c0_8 = arith.constant 0 : index
      %c0_9 = arith.constant 0 : index
      %13 = vector.load %arg13[%c0_8, %c0_9] : memref<128x1xf32, #tpu.memory_space<vmem>>, vector<128x1xf32>
      %cst_10 = arith.constant 0.000000e+00 : f32
      %14 = vector.broadcast %cst_10 : f32 to vector<128x1xf32>
      %15 = arith.cmpf ogt, %13, %14 : vector<128x1xf32>
      %16 = math.rsqrt %13 : vector<128x1xf32>
      %cst_11 = arith.constant 0.000000e+00 : f32
      %17 = vector.broadcast %cst_11 : f32 to vector<128x1xf32>
      %18 = arith.select %15, %16, %17 : vector<128x1xi1>, vector<128x1xf32>
      %19 = vector.shape_cast %18 : vector<128x1xf32> to vector<128x1xf32>
      %20 = vector.broadcast %19 : vector<128x1xf32> to vector<128x128xf32>
      %c0_12 = arith.constant 0 : index
      %c0_13 = arith.constant 0 : index
      %21 = vector.load %arg11[%c0_12, %c0_13] : memref<128x128xf32, #tpu.memory_space<vmem>>, vector<128x128xf32>
      tpu.vector_store %arg11[%c0_12, %c0_13], %20 {strides = array<i32>} : memref<128x128xf32, #tpu.memory_space<vmem>>, vector<128x128xf32>,
      %c0_14 = arith.constant 0 : index
      %c0_15 = arith.constant 0 : index
      %22 = vector.load %arg3[%c0_14, %c0_15] : memref<128x128xbf16, #tpu.memory_space<vmem>>, vector<128x128xbf16>
      %c0_16 = arith.constant 0 : index
      %c0_17 = arith.constant 0 : index
      %23 = vector.load %arg4[%c0_16, %c0_17] : memref<128x512xbf16, #tpu.memory_space<vmem>>, vector<128x512xbf16>
      %cst_18 = arith.constant dense<0.000000e+00> : vector<128x512xf32>
      %24 = tpu.matmul %22, %23, %cst_18 {dimension_numbers = #tpu.dot_dimension_numbers<[1], [0], [0], [1], [0, 0, 1, 1], [], []>} : vector<128x128xbf16>, vector<128x512xbf16>, vector<128x512xf32> -> vector<128x512xf32>
      %c0_19 = arith.constant 0 : index
      %c0_20 = arith.constant 0 : index
      %25 = vector.load %arg5[%c0_19, %c0_20] : memref<1x512xf32, #tpu.memory_space<vmem>>, vector<1x512xf32>
      %26 = vector.broadcast %25 : vector<1x512xf32> to vector<128x512xf32>
      %27 = arith.mulf %24, %26 : vector<128x512xf32>
      %c0_21 = arith.constant 0 : index
      %c0_22 = arith.constant 0 : index
      %28 = vector.load %arg6[%c0_21, %c0_22] : memref<1x512xf32, #tpu.memory_space<vmem>>, vector<1x512xf32>
      %29 = vector.broadcast %28 : vector<1x512xf32> to vector<128x512xf32>
      %30 = arith.addf %27, %29 : vector<128x512xf32>
      %cst_23 = arith.constant 0.000000e+00 : f32
      %31 = vector.broadcast %cst_23 : f32 to vector<128x512xf32>
      %32 = arith.maximumf %30, %31 : vector<128x512xf32>
      %33 = arith.truncf %32 : vector<128x512xf32> to vector<128x512xbf16>
      %c0_24 = arith.constant 0 : index
      %c0_25 = arith.constant 0 : index
      %34 = vector.load %arg7[%c0_24, %c0_25] : memref<512x128xbf16, #tpu.memory_space<vmem>>, vector<512x128xbf16>
      %cst_26 = arith.constant dense<0.000000e+00> : vector<128x128xf32>
      %35 = tpu.matmul %33, %34, %cst_26 {dimension_numbers = #tpu.dot_dimension_numbers<[1], [0], [0], [1], [0, 0, 1, 1], [], []>} : vector<128x512xbf16>, vector<512x128xbf16>, vector<128x128xf32> -> vector<128x128xf32>
      %c0_27 = arith.constant 0 : index
      %c0_28 = arith.constant 0 : index
      %36 = vector.load %arg8[%c0_27, %c0_28] : memref<1x128xf32, #tpu.memory_space<vmem>>, vector<1x128xf32>
      %37 = vector.broadcast %36 : vector<1x128xf32> to vector<128x128xf32>
      %38 = arith.mulf %35, %37 : vector<128x128xf32>
      %c0_29 = arith.constant 0 : index
      %c0_30 = arith.constant 0 : index
      %39 = vector.load %arg9[%c0_29, %c0_30] : memref<1x128xf32, #tpu.memory_space<vmem>>, vector<1x128xf32>
      %40 = vector.broadcast %39 : vector<1x128xf32> to vector<128x128xf32>
      %41 = arith.addf %38, %40 : vector<128x128xf32>
      %cst_31 = arith.constant 0.000000e+00 : f32
      %42 = vector.broadcast %cst_31 : f32 to vector<128x128xf32>
      %43 = arith.maximumf %41, %42 : vector<128x128xf32>
      %44 = arith.truncf %43 : vector<128x128xf32> to vector<128x128xbf16>
      %c0_32 = arith.constant 0 : index
      %c0_33 = arith.constant 0 : index
      %45 = vector.load %arg10[%c0_32, %c0_33] : memref<128x128xbf16, #tpu.memory_space<vmem>>, vector<128x128xbf16>
      %cst_34 = arith.constant dense<0.000000e+00> : vector<128x128xf32>
      %46 = tpu.matmul %44, %45, %cst_34 {dimension_numbers = #tpu.dot_dimension_numbers<[1], [0], [0], [1], [0, 0, 1, 1], [], []>} : vector<128x128xbf16>, vector<128x128xbf16>, vector<128x128xf32> -> vector<128x128xf32>
      %47 = vector.broadcast %18 : vector<128x1xf32> to vector<128x128xf32>
      %48 = arith.mulf %47, %46 : vector<128x128xf32>
      %49 = arith.truncf %48 : vector<128x128xf32> to vector<128x128xbf16>
      %c0_35 = arith.constant 0 : index
      %c0_36 = arith.constant 0 : index
      %50 = vector.load %arg12[%c0_35, %c0_36] : memref<128x128xbf16, #tpu.memory_space<vmem>>, vector<128x128xbf16>
      tpu.vector_store %arg12[%c0_35, %c0_36], %49 {strides = array<i32>} : memref<128x128xbf16, #tpu.memory_space<vmem>>, vector<128x128xbf16>,
    } else {
    }
    return
  }
  func.func @transform_0(%arg0: i32, %arg1: i32) -> (i32, i32) {
    %c0_i32 = arith.constant 0 : i32
    return %arg0, %arg1 : i32, i32
  }
  func.func @transform_1(%arg0: i32, %arg1: i32) -> (i32, i32) {
    %c0_i32 = arith.constant 0 : i32
    %c0_i32_0 = arith.constant 0 : i32
    return %arg0, %c0_i32 : i32, i32
  }
  func.func @transform_2(%arg0: i32, %arg1: i32) -> (i32, i32) {
    %c0_i32 = arith.constant 0 : i32
    %c0_i32_0 = arith.constant 0 : i32
    %c0_i32_1 = arith.constant 0 : i32
    return %c0_i32, %c0_i32_0 : i32, i32
  }
  func.func @transform_3(%arg0: i32, %arg1: i32) -> (i32, i32) {
    %c0_i32 = arith.constant 0 : i32
    %c0_i32_0 = arith.constant 0 : i32
    %c0_i32_1 = arith.constant 0 : i32
    return %c0_i32, %c0_i32_0 : i32, i32
  }
  func.func @transform_4(%arg0: i32, %arg1: i32) -> (i32, i32) {
    %c0_i32 = arith.constant 0 : i32
    %c0_i32_0 = arith.constant 0 : i32
    %c0_i32_1 = arith.constant 0 : i32
    return %c0_i32, %c0_i32_0 : i32, i32
  }
  func.func @transform_5(%arg0: i32, %arg1: i32) -> (i32, i32) {
    %c0_i32 = arith.constant 0 : i32
    %c0_i32_0 = arith.constant 0 : i32
    %c0_i32_1 = arith.constant 0 : i32
    return %c0_i32, %c0_i32_0 : i32, i32
  }
  func.func @transform_6(%arg0: i32, %arg1: i32) -> (i32, i32) {
    %c0_i32 = arith.constant 0 : i32
    %c0_i32_0 = arith.constant 0 : i32
    %c0_i32_1 = arith.constant 0 : i32
    return %c0_i32, %c0_i32_0 : i32, i32
  }
  func.func @transform_7(%arg0: i32, %arg1: i32) -> (i32, i32) {
    %c0_i32 = arith.constant 0 : i32
    %c0_i32_0 = arith.constant 0 : i32
    %c0_i32_1 = arith.constant 0 : i32
    return %c0_i32, %c0_i32_0 : i32, i32
  }
  func.func @transform_8(%arg0: i32, %arg1: i32) -> (i32, i32) {
    %c0_i32 = arith.constant 0 : i32
    %c0_i32_0 = arith.constant 0 : i32
    %c0_i32_1 = arith.constant 0 : i32
    return %c0_i32, %c0_i32_0 : i32, i32
  }
  func.func @transform_9(%arg0: i32, %arg1: i32) -> (i32, i32) {
    %c0_i32 = arith.constant 0 : i32
    %c0_i32_0 = arith.constant 0 : i32
    return %arg0, %c0_i32 : i32, i32
  }
  func.func @transform_10(%arg0: i32, %arg1: i32) -> (i32, i32) {
    %c0_i32 = arith.constant 0 : i32
    %c0_i32_0 = arith.constant 0 : i32
    return %arg0, %c0_i32 : i32, i32
  }
}

</mosaic_0001>

<llo_original>
// kernel: tpu_custom_call.1
$region0: #{tpu_custom_call.1}
  #allocation0 [shape = 'u32[]', space=smem, size = 0x4, offset = 0x4, fixed_abs, tag = 'smem constant byte address 0x4 - core index']
  #allocation1 [shape = 'u32[144,128]{1,0:T(1,128)}', space=vmem, size = 0x12000, scoped, tag = 'internal scratch']
  #allocation2 [shape = 'f32[128,1]{1,0:T(8,128)}', space=vmem, size = 0x10000, scoped, tag = 'scratch operand']
  %s0 = inlined_call_operand.hbm [shape: s8[128,128], index: 0, kind: input, shape index: {}]
  %s1 = inlined_call_operand.hbm [shape: bf16[128,128], index: 1, kind: input, shape index: {}]
  %s2 = inlined_call_operand.hbm [shape: bf16[128,512], index: 2, kind: input, shape index: {}]
  %s3 = inlined_call_operand.vmem [shape: f32[1,512], index: 3, kind: input, shape index: {}]
  %s4 = inlined_call_operand.hbm [shape: f32[1,512], index: 4, kind: input, shape index: {}]
  %s5 = inlined_call_operand.hbm [shape: bf16[512,128], index: 5, kind: input, shape index: {}]
  %s6 = inlined_call_operand.vmem [shape: f32[1,128], index: 6, kind: input, shape index: {}]
  %s7 = inlined_call_operand.vmem [shape: f32[1,128], index: 7, kind: input, shape index: {}]
  %s8 = inlined_call_operand.hbm [shape: bf16[128,128], index: 8, kind: input, shape index: {}]
  %s9 = inlined_call_operand.hbm [shape: f32[128,128], index: 9, kind: output, shape index: {0}]
  %s10 = inlined_call_operand.hbm [shape: bf16[128,128], index: 10, kind: output, shape index: {1}]
  %11 = xla_tuple %s9, %s10
  %s12 = sld [smem:[#allocation0]]
  $region86: #{tpu_custom_call.1} parent=0
    _
  %s14 = ssub.s32 1, %s12
  %s15 = scalar_select 0, %s14, %s12
  $region1: #{tpu_custom_call.1} parent=0
    #allocation3 [shape = 'u8[16384]{0}', space=vmem, size = 0x4000, scoped, tag = 'input window, operand 0, single buffered']
    #allocation4 [shape = 's32[1]{0}', space=sflag, size = 0x4, scoped, tag = 'scoped memory for tpu_custom_call.1']
    #allocation5 [shape = 's32[1]{0}', space=sflag, size = 0x4, scoped, tag = 'scoped memory for tpu_custom_call.1']
    #allocation6 [shape = 'u8[32768]{0}', space=vmem, size = 0x8000, scoped, tag = 'input window, operand 1, single buffered']
    #allocation7 [shape = 's32[1]{0}', space=sflag, size = 0x4, scoped, tag = 'scoped memory for tpu_custom_call.1']
    #allocation8 [shape = 'u8[131072]{0}', space=vmem, size = 0x20000, scoped, tag = 'input window, operand 2, single buffered']
    #allocation9 [shape = 'u8[2048]{0}', space=vmem, size = 0x800, scoped, tag = 'input window, operand 4, single buffered']
    #allocation10 [shape = 's32[1]{0}', space=sflag, size = 0x4, scoped, tag = 'scoped memory for tpu_custom_call.1']
    #allocation11 [shape = 'u8[131072]{0}', space=vmem, size = 0x20000, scoped, tag = 'input window, operand 5, single buffered']
    #allocation12 [shape = 'u8[32768]{0}', space=vmem, size = 0x8000, scoped, tag = 'input window, operand 8, single buffered']
    #allocation13 [shape = 's32[1]{0}', space=sflag, size = 0x4, scoped, tag = 'scoped memory for tpu_custom_call.1']
    #allocation14 [shape = 'u8[65536]{0}', space=vmem, size = 0x10000, scoped, tag = 'output window, operand 0, single buffered']
    #allocation15 [shape = 'u8[32768]{0}', space=vmem, size = 0x8000, scoped, tag = 'output window, operand 1, single buffered']
    #allocation16 [shape = 's32[1]{0}', space=sflag, size = 0x4, scoped, tag = 'scoped memory for tpu_custom_call.1']
    %16 = vsyncpa [#allocation4], 0
    %17 = vsyncpa [#allocation7], 0
    %18 = vsyncpa [#allocation10], 0
    %19 = vsyncpa [#allocation13], 0
    %20 = vsyncpa [#allocation5], 0
    %21 = vsyncpa [#allocation16], 0
    // Predicated region
    $region2: #{tpu_custom_call.1} parent=1 // pred_check
      _
    $region3: #{tpu_custom_call.1} parent=1 // pred_check_branch
      %23 = sbr.rel (0) target = $region5
    $region4: #{tpu_custom_call.1} parent=1 // pred_region
      %s25 = ssub.s32 512, 512
      %26 = vsyncadd [#allocation4], %s25
      %s27 = sshll.u32 [#allocation3], 4
      %s28 = int_to_ptr.vmem [resolvable:$true] %s27
      %33 = dma.hbm_to_vmem [thread:$0]  %s0, 512, %s28, [#allocation4], 128, 128, 8
    $region5: #{tpu_custom_call.1} parent=1 // pred_fallthru
      _
    // Predicated region
    $region6: #{tpu_custom_call.1} parent=1 // pred_check
      _
    $region7: #{tpu_custom_call.1} parent=1 // pred_check_branch
      %35 = sbr.rel (0) target = $region9
    $region8: #{tpu_custom_call.1} parent=1 // pred_region
      %s37 = ssub.s32 1024, 1024
      %38 = vsyncadd [#allocation7], %s37
      %s39 = sshll.u32 [#allocation6], 4
      %s40 = int_to_ptr.vmem [resolvable:$true] %s39
      %45 = dma.hbm_to_vmem [thread:$0]  %s1, 1024, %s40, [#allocation7], 64, 64, 4
    $region9: #{tpu_custom_call.1} parent=1 // pred_fallthru
      _
    // Predicated region
    $region10: #{tpu_custom_call.1} parent=1 // pred_check
      _
    $region11: #{tpu_custom_call.1} parent=1 // pred_check_branch
      %47 = sbr.rel (0) target = $region13
    $region12: #{tpu_custom_call.1} parent=1 // pred_region
      %s49 = ssub.s32 4096, 4096
      %50 = vsyncadd [#allocation7], %s49
      %s51 = sshll.u32 [#allocation8], 4
      %s52 = int_to_ptr.vmem [resolvable:$true] %s51
      %57 = dma.hbm_to_vmem [thread:$0]  %s2, 4096, %s52, [#allocation7], 256, 256, 16
    $region13: #{tpu_custom_call.1} parent=1 // pred_fallthru
      _
    // Predicated region
    $region14: #{tpu_custom_call.1} parent=1 // pred_check
      _
    $region15: #{tpu_custom_call.1} parent=1 // pred_check_branch
      %59 = sbr.rel (0) target = $region17
    $region16: #{tpu_custom_call.1} parent=1 // pred_region
      _
    $region17: #{tpu_custom_call.1} parent=1 // pred_fallthru
      _
    // Predicated region
    $region18: #{tpu_custom_call.1} parent=1 // pred_check
      _
    $region19: #{tpu_custom_call.1} parent=1 // pred_check_branch
      %61 = sbr.rel (0) target = $region21
    $region20: #{tpu_custom_call.1} parent=1 // pred_region
      %s63 = ssub.s32 64, 64
      %64 = vsyncadd [#allocation10], %s63
      %s66 = sshll.u32 [#allocation9], 4
      %s67 = int_to_ptr.vmem [resolvable:$true] %s66
      %69 = dma.hbm_to_vmem [thread:$0]  %s4, 64, %s67, [#allocation10]
    $region21: #{tpu_custom_call.1} parent=1 // pred_fallthru
      _
    // Predicated region
    $region22: #{tpu_custom_call.1} parent=1 // pred_check
      _
    $region23: #{tpu_custom_call.1} parent=1 // pred_check_branch
      %71 = sbr.rel (0) target = $region25
    $region24: #{tpu_custom_call.1} parent=1 // pred_region
      %s73 = ssub.s32 4096, 4096
      %74 = vsyncadd [#allocation10], %s73
      %s75 = sshll.u32 [#allocation11], 4
      %s76 = int_to_ptr.vmem [resolvable:$true] %s75
      %81 = dma.hbm_to_vmem [thread:$0]  %s5, 4096, %s76, [#allocation10], 64, 64, 4
    $region25: #{tpu_custom_call.1} parent=1 // pred_fallthru
      _
    // Predicated region
    $region26: #{tpu_custom_call.1} parent=1 // pred_check
      _
    $region27: #{tpu_custom_call.1} parent=1 // pred_check_branch
      %83 = sbr.rel (0) target = $region29
    $region28: #{tpu_custom_call.1} parent=1 // pred_region
      _
    $region29: #{tpu_custom_call.1} parent=1 // pred_fallthru
      _
    // Predicated region
    $region30: #{tpu_custom_call.1} parent=1 // pred_check
      _
    $region31: #{tpu_custom_call.1} parent=1 // pred_check_branch
      %85 = sbr.rel (0) target = $region33
    $region32: #{tpu_custom_call.1} parent=1 // pred_region
      _
    $region33: #{tpu_custom_call.1} parent=1 // pred_fallthru
      _
    // Predicated region
    $region34: #{tpu_custom_call.1} parent=1 // pred_check
      _
    $region35: #{tpu_custom_call.1} parent=1 // pred_check_branch
      %87 = sbr.rel (0) target = $region37
    $region36: #{tpu_custom_call.1} parent=1 // pred_region
      %s89 = ssub.s32 1024, 1024
      %90 = vsyncadd [#allocation13], %s89
      %s91 = sshll.u32 [#allocation12], 4
      %s92 = int_to_ptr.vmem [resolvable:$true] %s91
      %97 = dma.hbm_to_vmem [thread:$0]  %s8, 1024, %s92, [#allocation13], 64, 64, 4
    $region37: #{tpu_custom_call.1} parent=1 // pred_fallthru
      _
    // Predicated region
    $region38: #{tpu_custom_call.1} parent=1 // pred_check
      _
    $region39: #{tpu_custom_call.1} parent=1 // pred_check_branch
      %99 = sbr.rel (0) target = $region41
    $region40: #{tpu_custom_call.1} parent=1 // pred_region
      %100 = dma.done [#allocation4], 512
    $region41: #{tpu_custom_call.1} parent=1 // pred_fallthru
      _
    // Predicated region
    $region42: #{tpu_custom_call.1} parent=1 // pred_check
      _
    $region43: #{tpu_custom_call.1} parent=1 // pred_check_branch
      %102 = sbr.rel (0) target = $region45
    $region44: #{tpu_custom_call.1} parent=1 // pred_region
      %103 = dma.done [#allocation7], 1024
    $region45: #{tpu_custom_call.1} parent=1 // pred_fallthru
      _
    // Predicated region
    $region46: #{tpu_custom_call.1} parent=1 // pred_check
      _
    $region47: #{tpu_custom_call.1} parent=1 // pred_check_branch
      %105 = sbr.rel (0) target = $region49
    $region48: #{tpu_custom_call.1} parent=1 // pred_region
      %106 = dma.done [#allocation7], 4096
    $region49: #{tpu_custom_call.1} parent=1 // pred_fallthru
      _
    // Predicated region
    $region50: #{tpu_custom_call.1} parent=1 // pred_check
      _
    $region51: #{tpu_custom_call.1} parent=1 // pred_check_branch
      %108 = sbr.rel (0) target = $region53
    $region52: #{tpu_custom_call.1} parent=1 // pred_region
      %109 = dma.done [#allocation10], 64
    $region53: #{tpu_custom_call.1} parent=1 // pred_fallthru
      _
    // Predicated region
    $region54: #{tpu_custom_call.1} parent=1 // pred_check
      _
    $region55: #{tpu_custom_call.1} parent=1 // pred_check_branch
      %111 = sbr.rel (0) target = $region57
    $region56: #{tpu_custom_call.1} parent=1 // pred_region
      %112 = dma.done [#allocation10], 4096
    $region57: #{tpu_custom_call.1} parent=1 // pred_fallthru
      _
    // Predicated region
    $region58: #{tpu_custom_call.1} parent=1 // pred_check
      _
    $region59: #{tpu_custom_call.1} parent=1 // pred_check_branch
      %114 = sbr.rel (0) target = $region61
    $region60: #{tpu_custom_call.1} parent=1 // pred_region
      %115 = dma.done [#allocation13], 1024
    $region61: #{tpu_custom_call.1} parent=1 // pred_fallthru
      _
    %p117 = scmp.eq.s32.totalorder 0, 0
    // Predicated region
    $region62: #{tpu_custom_call.1} parent=1 // pred_check
      %p118 = pneg %p117
    $region63: #{tpu_custom_call.1} parent=1 // pred_check_branch
      %120 = sbr.rel (%p118) target = $region65
    $region64: #{tpu_custom_call.1} parent=1 // pred_region
      %vm121 = vcmask 7168
      %122 = vst.msk [vmem:[#allocation2] sm:$0xff] %vm121, 0.0
      %123 = vst.msk [vmem:[#allocation2 + $0x8] sm:$0xff] %vm121, 0.0
      %124 = vst.msk [vmem:[#allocation2 + $0x10] sm:$0xff] %vm121, 0.0
      %125 = vst.msk [vmem:[#allocation2 + $0x18] sm:$0xff] %vm121, 0.0
      %126 = vst.msk [vmem:[#allocation2 + $0x20] sm:$0xff] %vm121, 0.0
      %127 = vst.msk [vmem:[#allocation2 + $0x28] sm:$0xff] %vm121, 0.0
      %128 = vst.msk [vmem:[#allocation2 + $0x30] sm:$0xff] %vm121, 0.0
      %129 = vst.msk [vmem:[#allocation2 + $0x38] sm:$0xff] %vm121, 0.0
      %130 = vst.msk [vmem:[#allocation2 + $0x40] sm:$0xff] %vm121, 0.0
      %131 = vst.msk [vmem:[#allocation2 + $0x48] sm:$0xff] %vm121, 0.0
      %132 = vst.msk [vmem:[#allocation2 + $0x50] sm:$0xff] %vm121, 0.0
      %133 = vst.msk [vmem:[#allocation2 + $0x58] sm:$0xff] %vm121, 0.0
      %134 = vst.msk [vmem:[#allocation2 + $0x60] sm:$0xff] %vm121, 0.0
      %135 = vst.msk [vmem:[#allocation2 + $0x68] sm:$0xff] %vm121, 0.0
      %136 = vst.msk [vmem:[#allocation2 + $0x70] sm:$0xff] %vm121, 0.0
      %137 = vst.msk [vmem:[#allocation2 + $0x78] sm:$0xff] %vm121, 0.0
    $region65: #{tpu_custom_call.1} parent=1 // pred_fallthru
      _
    %v138 = vld [vmem:[#allocation2] sm:$0xff]
    %v139 = vld [vmem:[#allocation2 + $0x8] sm:$0xff]
    %v140 = vld [vmem:[#allocation2 + $0x10] sm:$0xff]
    %v141 = vld [vmem:[#allocation2 + $0x18] sm:$0xff]
    %v142 = vld [vmem:[#allocation2 + $0x20] sm:$0xff]
    %v143 = vld [vmem:[#allocation2 + $0x28] sm:$0xff]
    %v144 = vld [vmem:[#allocation2 + $0x30] sm:$0xff]
    %v145 = vld [vmem:[#allocation2 + $0x38] sm:$0xff]
    %v146 = vld [vmem:[#allocation2 + $0x40] sm:$0xff]
    %v147 = vld [vmem:[#allocation2 + $0x48] sm:$0xff]
    %v148 = vld [vmem:[#allocation2 + $0x50] sm:$0xff]
    %v149 = vld [vmem:[#allocation2 + $0x58] sm:$0xff]
    %v150 = vld [vmem:[#allocation2 + $0x60] sm:$0xff]
    %v151 = vld [vmem:[#allocation2 + $0x68] sm:$0xff]
    %v152 = vld [vmem:[#allocation2 + $0x70] sm:$0xff]
    %v153 = vld [vmem:[#allocation2 + $0x78] sm:$0xff]
    %v154 = vld [vmem:[#allocation3] sm:$0xff]
    %v155 = vld [vmem:[#allocation3 + $0x8] sm:$0xff]
    %v156 = vld [vmem:[#allocation3 + $0x10] sm:$0xff]
    %v157 = vld [vmem:[#allocation3 + $0x18] sm:$0xff]
    %v158 = vunpack.c.0.s8 %v154
    %v159 = vunpack.c.1.s8 %v154
    %v160 = vunpack.c.2.s8 %v154
    %v161 = vunpack.c.3.s8 %v154
    %v162 = vunpack.c.0.s8 %v155
    %v163 = vunpack.c.1.s8 %v155
    %v164 = vunpack.c.2.s8 %v155
    %v165 = vunpack.c.3.s8 %v155
    %v166 = vunpack.c.0.s8 %v156
    %v167 = vunpack.c.1.s8 %v156
    %v168 = vunpack.c.2.s8 %v156
    %v169 = vunpack.c.3.s8 %v156
    %v170 = vunpack.c.0.s8 %v157
    %v171 = vunpack.c.1.s8 %v157
    %v172 = vunpack.c.2.s8 %v157
    %v173 = vunpack.c.3.s8 %v157
    %v174 = vcvt.s32.f32 %v158
    %v175 = vcvt.s32.f32 %v159
    %v176 = vcvt.s32.f32 %v160
    %v177 = vcvt.s32.f32 %v161
    %v178 = vcvt.s32.f32 %v162
    %v179 = vcvt.s32.f32 %v163
    %v180 = vcvt.s32.f32 %v164
    %v181 = vcvt.s32.f32 %v165
    %v182 = vcvt.s32.f32 %v166
    %v183 = vcvt.s32.f32 %v167
    %v184 = vcvt.s32.f32 %v168
    %v185 = vcvt.s32.f32 %v169
    %v186 = vcvt.s32.f32 %v170
    %v187 = vcvt.s32.f32 %v171
    %v188 = vcvt.s32.f32 %v172
    %v189 = vcvt.s32.f32 %v173
    %190 = vadd.xlane.f32.xlu0 %v174
    %v191 = vpop.xlane.xlu0 %190
    %192 = vadd.xlane.f32.xlu0 %v175
    %v193 = vpop.xlane.xlu0 %192
    %194 = vadd.xlane.f32.xlu0 %v176
    %v195 = vpop.xlane.xlu0 %194
    %196 = vadd.xlane.f32.xlu0 %v177
    %v197 = vpop.xlane.xlu0 %196
    %198 = vadd.xlane.f32.xlu0 %v178
    %v199 = vpop.xlane.xlu0 %198
    %200 = vadd.xlane.f32.xlu0 %v179
    %v201 = vpop.xlane.xlu0 %200
    %202 = vadd.xlane.f32.xlu0 %v180
    %v203 = vpop.xlane.xlu0 %202
    %204 = vadd.xlane.f32.xlu0 %v181
    %v205 = vpop.xlane.xlu0 %204
    %206 = vadd.xlane.f32.xlu0 %v182
    %v207 = vpop.xlane.xlu0 %206
    %208 = vadd.xlane.f32.xlu0 %v183
    %v209 = vpop.xlane.xlu0 %208
    %210 = vadd.xlane.f32.xlu0 %v184
    %v211 = vpop.xlane.xlu0 %210
    %212 = vadd.xlane.f32.xlu0 %v185
    %v213 = vpop.xlane.xlu0 %212
    %214 = vadd.xlane.f32.xlu0 %v186
    %v215 = vpop.xlane.xlu0 %214
    %216 = vadd.xlane.f32.xlu0 %v187
    %v217 = vpop.xlane.xlu0 %216
    %218 = vadd.xlane.f32.xlu0 %v188
    %v219 = vpop.xlane.xlu0 %218
    %220 = vadd.xlane.f32.xlu0 %v189
    %v221 = vpop.xlane.xlu0 %220
    %v222 = vadd.f32 %v138, %v191
    %v223 = vadd.f32 %v139, %v193
    %v224 = vadd.f32 %v140, %v195
    %v225 = vadd.f32 %v141, %v197
    %v226 = vadd.f32 %v142, %v199
    %v227 = vadd.f32 %v143, %v201
    %v228 = vadd.f32 %v144, %v203
    %v229 = vadd.f32 %v145, %v205
    %v230 = vadd.f32 %v146, %v207
    %v231 = vadd.f32 %v147, %v209
    %v232 = vadd.f32 %v148, %v211
    %v233 = vadd.f32 %v149, %v213
    %v234 = vadd.f32 %v150, %v215
    %v235 = vadd.f32 %v151, %v217
    %v236 = vadd.f32 %v152, %v219
    %v237 = vadd.f32 %v153, %v221
    %vm238 = vcmask 7168
    %239 = vst.msk [vmem:[#allocation2] sm:$0xff] %vm238, %v222
    %240 = vst.msk [vmem:[#allocation2 + $0x8] sm:$0xff] %vm238, %v223
    %241 = vst.msk [vmem:[#allocation2 + $0x10] sm:$0xff] %vm238, %v224
    %242 = vst.msk [vmem:[#allocation2 + $0x18] sm:$0xff] %vm238, %v225
    %243 = vst.msk [vmem:[#allocation2 + $0x20] sm:$0xff] %vm238, %v226
    %244 = vst.msk [vmem:[#allocation2 + $0x28] sm:$0xff] %vm238, %v227
    %245 = vst.msk [vmem:[#allocation2 + $0x30] sm:$0xff] %vm238, %v228
    %246 = vst.msk [vmem:[#allocation2 + $0x38] sm:$0xff] %vm238, %v229
    %247 = vst.msk [vmem:[#allocation2 + $0x40] sm:$0xff] %vm238, %v230
    %248 = vst.msk [vmem:[#allocation2 + $0x48] sm:$0xff] %vm238, %v231
    %249 = vst.msk [vmem:[#allocation2 + $0x50] sm:$0xff] %vm238, %v232
    %250 = vst.msk [vmem:[#allocation2 + $0x58] sm:$0xff] %vm238, %v233
    %251 = vst.msk [vmem:[#allocation2 + $0x60] sm:$0xff] %vm238, %v234
    %252 = vst.msk [vmem:[#allocation2 + $0x68] sm:$0xff] %vm238, %v235
    %253 = vst.msk [vmem:[#allocation2 + $0x70] sm:$0xff] %vm238, %v236
    %254 = vst.msk [vmem:[#allocation2 + $0x78] sm:$0xff] %vm238, %v237
    // Predicated region
    $region66: #{tpu_custom_call.1} parent=1 // pred_check
      %p255 = pneg %p117
    $region67: #{tpu_custom_call.1} parent=1 // pred_check_branch
      %257 = sbr.rel (%p255) target = $region69
    $region68: #{tpu_custom_call.1} parent=1 // pred_region
      %v258 = vld [vmem:[#allocation2] sm:$0xff]
      %v259 = vld [vmem:[#allocation2 + $0x8] sm:$0xff]
      %v260 = vld [vmem:[#allocation2 + $0x10] sm:$0xff]
      %v261 = vld [vmem:[#allocation2 + $0x18] sm:$0xff]
      %v262 = vld [vmem:[#allocation2 + $0x20] sm:$0xff]
      %v263 = vld [vmem:[#allocation2 + $0x28] sm:$0xff]
      %v264 = vld [vmem:[#allocation2 + $0x30] sm:$0xff]
      %v265 = vld [vmem:[#allocation2 + $0x38] sm:$0xff]
      %v266 = vld [vmem:[#allocation2 + $0x40] sm:$0xff]
      %v267 = vld [vmem:[#allocation2 + $0x48] sm:$0xff]
      %v268 = vld [vmem:[#allocation2 + $0x50] sm:$0xff]
      %v269 = vld [vmem:[#allocation2 + $0x58] sm:$0xff]
      %v270 = vld [vmem:[#allocation2 + $0x60] sm:$0xff]
      %v271 = vld [vmem:[#allocation2 + $0x68] sm:$0xff]
      %v272 = vld [vmem:[#allocation2 + $0x70] sm:$0xff]
      %v273 = vld [vmem:[#allocation2 + $0x78] sm:$0xff]
      %vm274 = vcmp.gt.f32.partialorder %v258, 0.0
      %vm275 = vcmp.gt.f32.partialorder %v259, 0.0
      %vm276 = vcmp.gt.f32.partialorder %v260, 0.0
      %vm277 = vcmp.gt.f32.partialorder %v261, 0.0
      %vm278 = vcmp.gt.f32.partialorder %v262, 0.0
      %vm279 = vcmp.gt.f32.partialorder %v263, 0.0
      %vm280 = vcmp.gt.f32.partialorder %v264, 0.0
      %vm281 = vcmp.gt.f32.partialorder %v265, 0.0
      %vm282 = vcmp.gt.f32.partialorder %v266, 0.0
      %vm283 = vcmp.gt.f32.partialorder %v267, 0.0
      %vm284 = vcmp.gt.f32.partialorder %v268, 0.0
      %vm285 = vcmp.gt.f32.partialorder %v269, 0.0
      %vm286 = vcmp.gt.f32.partialorder %v270, 0.0
      %vm287 = vcmp.gt.f32.partialorder %v271, 0.0
      %vm288 = vcmp.gt.f32.partialorder %v272, 0.0
      %vm289 = vcmp.gt.f32.partialorder %v273, 0.0
      %v290 = vrsqrt.pop %v258
      %v291 = vrsqrt.pop %v259
      %v292 = vrsqrt.pop %v260
      %v293 = vrsqrt.pop %v261
      %v294 = vrsqrt.pop %v262
      %v295 = vrsqrt.pop %v263
      %v296 = vrsqrt.pop %v264
      %v297 = vrsqrt.pop %v265
      %v298 = vrsqrt.pop %v266
      %v299 = vrsqrt.pop %v267
      %v300 = vrsqrt.pop %v268
      %v301 = vrsqrt.pop %v269
      %v302 = vrsqrt.pop %v270
      %v303 = vrsqrt.pop %v271
      %v304 = vrsqrt.pop %v272
      %v305 = vrsqrt.pop %v273
      %v306 = vsel %vm274, %v290, 0.0
      %v307 = vsel %vm275, %v291, 0.0
      %v308 = vsel %vm276, %v292, 0.0
      %v309 = vsel %vm277, %v293, 0.0
      %v310 = vsel %vm278, %v294, 0.0
      %v311 = vsel %vm279, %v295, 0.0
      %v312 = vsel %vm280, %v296, 0.0
      %v313 = vsel %vm281, %v297, 0.0
      %v314 = vsel %vm282, %v298, 0.0
      %v315 = vsel %vm283, %v299, 0.0
      %v316 = vsel %vm284, %v300, 0.0
      %v317 = vsel %vm285, %v301, 0.0
      %v318 = vsel %vm286, %v302, 0.0
      %v319 = vsel %vm287, %v303, 0.0
      %v320 = vsel %vm288, %v304, 0.0
      %v321 = vsel %vm289, %v305, 0.0
      %323 = vset.pattern.permute.xlu0 0
      %324 = vperm.xlu0 %323, %v306
      %v325 = vpop.permute.xlu0 %324
      %328 = vset.pattern.permute.xlu0 0
      %329 = vperm.xlu0 %328, %v307
      %v330 = vpop.permute.xlu0 %329
      %333 = vset.pattern.permute.xlu0 0
      %334 = vperm.xlu0 %333, %v308
      %v335 = vpop.permute.xlu0 %334
      %338 = vset.pattern.permute.xlu0 0
      %339 = vperm.xlu0 %338, %v309
      %v340 = vpop.permute.xlu0 %339
      %343 = vset.pattern.permute.xlu0 0
      %344 = vperm.xlu0 %343, %v310
      %v345 = vpop.permute.xlu0 %344
      %348 = vset.pattern.permute.xlu0 0
      %349 = vperm.xlu0 %348, %v311
      %v350 = vpop.permute.xlu0 %349
      %353 = vset.pattern.permute.xlu0 0
      %354 = vperm.xlu0 %353, %v312
      %v355 = vpop.permute.xlu0 %354
      %358 = vset.pattern.permute.xlu0 0
      %359 = vperm.xlu0 %358, %v313
      %v360 = vpop.permute.xlu0 %359
      %363 = vset.pattern.permute.xlu0 0
      %364 = vperm.xlu0 %363, %v314
      %v365 = vpop.permute.xlu0 %364
      %368 = vset.pattern.permute.xlu0 0
      %369 = vperm.xlu0 %368, %v315
      %v370 = vpop.permute.xlu0 %369
      %373 = vset.pattern.permute.xlu0 0
      %374 = vperm.xlu0 %373, %v316
      %v375 = vpop.permute.xlu0 %374
      %378 = vset.pattern.permute.xlu0 0
      %379 = vperm.xlu0 %378, %v317
      %v380 = vpop.permute.xlu0 %379
      %383 = vset.pattern.permute.xlu0 0
      %384 = vperm.xlu0 %383, %v318
      %v385 = vpop.permute.xlu0 %384
      %388 = vset.pattern.permute.xlu0 0
      %389 = vperm.xlu0 %388, %v319
      %v390 = vpop.permute.xlu0 %389
      %393 = vset.pattern.permute.xlu0 0
      %394 = vperm.xlu0 %393, %v320
      %v395 = vpop.permute.xlu0 %394
      %398 = vset.pattern.permute.xlu0 0
      %399 = vperm.xlu0 %398, %v321
      %v400 = vpop.permute.xlu0 %399
      %402 = vst [vmem:[#allocation14] sm:$0xff] %v325
      %403 = vst [vmem:[#allocation14 + $0x8] sm:$0xff] %v330
      %404 = vst [vmem:[#allocation14 + $0x10] sm:$0xff] %v335
      %405 = vst [vmem:[#allocation14 + $0x18] sm:$0xff] %v340
      %406 = vst [vmem:[#allocation14 + $0x20] sm:$0xff] %v345
      %407 = vst [vmem:[#allocation14 + $0x28] sm:$0xff] %v350
      %408 = vst [vmem:[#allocation14 + $0x30] sm:$0xff] %v355
      %409 = vst [vmem:[#allocation14 + $0x38] sm:$0xff] %v360
      %410 = vst [vmem:[#allocation14 + $0x40] sm:$0xff] %v365
      %411 = vst [vmem:[#allocation14 + $0x48] sm:$0xff] %v370
      %412 = vst [vmem:[#allocation14 + $0x50] sm:$0xff] %v375
      %413 = vst [vmem:[#allocation14 + $0x58] sm:$0xff] %v380
      %414 = vst [vmem:[#allocation14 + $0x60] sm:$0xff] %v385
      %415 = vst [vmem:[#allocation14 + $0x68] sm:$0xff] %v390
      %416 = vst [vmem:[#allocation14 + $0x70] sm:$0xff] %v395
      %417 = vst [vmem:[#allocation14 + $0x78] sm:$0xff] %v400
      %v418 = vld [vmem:[#allocation6] sm:$0xf]
      %v419 = vld [vmem:[#allocation6 + $0x4] sm:$0xf]
      %v420 = vld [vmem:[#allocation6 + $0x8] sm:$0xf]
      %v421 = vld [vmem:[#allocation6 + $0xc] sm:$0xf]
      %v422 = vld [vmem:[#allocation6 + $0x10] sm:$0xf]
      %v423 = vld [vmem:[#allocation6 + $0x14] sm:$0xf]
      %v424 = vld [vmem:[#allocation6 + $0x18] sm:$0xf]
      %v425 = vld [vmem:[#allocation6 + $0x1c] sm:$0xf]
      %v426 = vld [vmem:[#allocation6 + $0x20] sm:$0xf]
      %v427 = vld [vmem:[#allocation6 + $0x24] sm:$0xf]
      %v428 = vld [vmem:[#allocation6 + $0x28] sm:$0xf]
      %v429 = vld [vmem:[#allocation6 + $0x2c] sm:$0xf]
      %v430 = vld [vmem:[#allocation6 + $0x30] sm:$0xf]
      %v431 = vld [vmem:[#allocation6 + $0x34] sm:$0xf]
      %v432 = vld [vmem:[#allocation6 + $0x38] sm:$0xf]
      %v433 = vld [vmem:[#allocation6 + $0x3c] sm:$0xf]
      %v434 = vld [vmem:[#allocation8] sm:$0xff]
      %v435 = vld [vmem:[#allocation8 + $0x8] sm:$0xff]
      %v436 = vld [vmem:[#allocation8 + $0x10] sm:$0xff]
      %v437 = vld [vmem:[#allocation8 + $0x18] sm:$0xff]
      %v438 = vld [vmem:[#allocation8 + $0x20] sm:$0xff]
      %v439 = vld [vmem:[#allocation8 + $0x28] sm:$0xff]
      %v440 = vld [vmem:[#allocation8 + $0x30] sm:$0xff]
      %v441 = vld [vmem:[#allocation8 + $0x38] sm:$0xff]
      %v442 = vld [vmem:[#allocation8 + $0x40] sm:$0xff]
      %v443 = vld [vmem:[#allocation8 + $0x48] sm:$0xff]
      %v444 = vld [vmem:[#allocation8 + $0x50] sm:$0xff]
      %v445 = vld [vmem:[#allocation8 + $0x58] sm:$0xff]
      %v446 = vld [vmem:[#allocation8 + $0x60] sm:$0xff]
      %v447 = vld [vmem:[#allocation8 + $0x68] sm:$0xff]
      %v448 = vld [vmem:[#allocation8 + $0x70] sm:$0xff]
      %v449 = vld [vmem:[#allocation8 + $0x78] sm:$0xff]
      %v450 = vld [vmem:[#allocation8 + $0x80] sm:$0xff]
      %v451 = vld [vmem:[#allocation8 + $0x88] sm:$0xff]
      %v452 = vld [vmem:[#allocation8 + $0x90] sm:$0xff]
      %v453 = vld [vmem:[#allocation8 + $0x98] sm:$0xff]
      %v454 = vld [vmem:[#allocation8 + $0xa0] sm:$0xff]
      %v455 = vld [vmem:[#allocation8 + $0xa8] sm:$0xff]
      %v456 = vld [vmem:[#allocation8 + $0xb0] sm:$0xff]
      %v457 = vld [vmem:[#allocation8 + $0xb8] sm:$0xff]
      %v458 = vld [vmem:[#allocation8 + $0xc0] sm:$0xff]
      %v459 = vld [vmem:[#allocation8 + $0xc8] sm:$0xff]
      %v460 = vld [vmem:[#allocation8 + $0xd0] sm:$0xff]
      %v461 = vld [vmem:[#allocation8 + $0xd8] sm:$0xff]
      %v462 = vld [vmem:[#allocation8 + $0xe0] sm:$0xff]
      %v463 = vld [vmem:[#allocation8 + $0xe8] sm:$0xff]
      %v464 = vld [vmem:[#allocation8 + $0xf0] sm:$0xff]
      %v465 = vld [vmem:[#allocation8 + $0xf8] sm:$0xff]
      %v482 = vunpack.c.l.b16 %v418
      %v483 = vunpack.c.l.b16 %v419
      %v484 = vunpack.c.l.b16 %v420
      %v485 = vunpack.c.l.b16 %v421
      %v486 = vunpack.c.l.b16 %v422
      %v487 = vunpack.c.l.b16 %v423
      %v488 = vunpack.c.l.b16 %v424
      %v489 = vunpack.c.l.b16 %v425
      %v490 = vunpack.c.l.b16 %v426
      %v491 = vunpack.c.l.b16 %v427
      %v492 = vunpack.c.l.b16 %v428
      %v493 = vunpack.c.l.b16 %v429
      %v494 = vunpack.c.l.b16 %v430
      %v495 = vunpack.c.l.b16 %v431
      %v496 = vunpack.c.l.b16 %v432
      %v497 = vunpack.c.l.b16 %v433
      %v498 = vpack.c.b16 %v483, %v482
      %v499 = vpack.c.b16 %v485, %v484
      %v500 = vpack.c.b16 %v487, %v486
      %v501 = vpack.c.b16 %v489, %v488
      %v502 = vpack.c.b16 %v491, %v490
      %v503 = vpack.c.b16 %v493, %v492
      %v504 = vpack.c.b16 %v495, %v494
      %v505 = vpack.c.b16 %v497, %v496
      %v546 = vunpack.c.l.b16 %v434
      %v547 = vunpack.c.h.b16 %v434
      %v548 = vunpack.c.l.b16 %v435
      %v549 = vunpack.c.h.b16 %v435
      %v550 = vunpack.c.l.b16 %v436
      %v551 = vunpack.c.h.b16 %v436
      %v552 = vunpack.c.l.b16 %v437
      %v553 = vunpack.c.h.b16 %v437
      %v554 = vunpack.c.l.b16 %v438
      %v555 = vunpack.c.h.b16 %v438
      %v556 = vunpack.c.l.b16 %v439
      %v557 = vunpack.c.h.b16 %v439
      %v558 = vunpack.c.l.b16 %v440
      %v559 = vunpack.c.h.b16 %v440
      %v560 = vunpack.c.l.b16 %v441
      %v561 = vunpack.c.h.b16 %v441
      %v562 = vunpack.c.l.b16 %v442
      %v563 = vunpack.c.h.b16 %v442
      %v564 = vunpack.c.l.b16 %v443
      %v565 = vunpack.c.h.b16 %v443
      %v566 = vunpack.c.l.b16 %v444
      %v567 = vunpack.c.h.b16 %v444
      %v568 = vunpack.c.l.b16 %v445
      %v569 = vunpack.c.h.b16 %v445
      %v570 = vunpack.c.l.b16 %v446
      %v571 = vunpack.c.h.b16 %v446
      %v572 = vunpack.c.l.b16 %v447
      %v573 = vunpack.c.h.b16 %v447
      %v574 = vunpack.c.l.b16 %v448
      %v575 = vunpack.c.h.b16 %v448
      %v576 = vunpack.c.l.b16 %v449
      %v577 = vunpack.c.h.b16 %v449
      %v578 = vunpack.c.l.b16 %v450
      %v579 = vunpack.c.h.b16 %v450
      %v580 = vunpack.c.l.b16 %v451
      %v581 = vunpack.c.h.b16 %v451
      %v582 = vunpack.c.l.b16 %v452
      %v583 = vunpack.c.h.b16 %v452
      %v584 = vunpack.c.l.b16 %v453
      %v585 = vunpack.c.h.b16 %v453
      %v586 = vunpack.c.l.b16 %v454
      %v587 = vunpack.c.h.b16 %v454
      %v588 = vunpack.c.l.b16 %v455
      %v589 = vunpack.c.h.b16 %v455
      %v590 = vunpack.c.l.b16 %v456
      %v591 = vunpack.c.h.b16 %v456
      %v592 = vunpack.c.l.b16 %v457
      %v593 = vunpack.c.h.b16 %v457
      %v594 = vunpack.c.l.b16 %v458
      %v595 = vunpack.c.h.b16 %v458
      %v596 = vunpack.c.l.b16 %v459
      %v597 = vunpack.c.h.b16 %v459
      %v598 = vunpack.c.l.b16 %v460
      %v599 = vunpack.c.h.b16 %v460
      %v600 = vunpack.c.l.b16 %v461
      %v601 = vunpack.c.h.b16 %v461
      %v602 = vunpack.c.l.b16 %v462
      %v603 = vunpack.c.h.b16 %v462
      %v604 = vunpack.c.l.b16 %v463
      %v605 = vunpack.c.h.b16 %v463
      %v606 = vunpack.c.l.b16 %v464
      %v607 = vunpack.c.h.b16 %v464
      %v608 = vunpack.c.l.b16 %v465
      %v609 = vunpack.c.h.b16 %v465
      %v610 = vpack.c.b16 %v550, %v546
      %v611 = vpack.c.b16 %v551, %v547
      %v612 = vpack.c.b16 %v552, %v548
      %v613 = vpack.c.b16 %v553, %v549
      %v614 = vpack.c.b16 %v558, %v554
      %v615 = vpack.c.b16 %v559, %v555
      %v616 = vpack.c.b16 %v560, %v556
      %v617 = vpack.c.b16 %v561, %v557
      %v618 = vpack.c.b16 %v566, %v562
      %v619 = vpack.c.b16 %v567, %v563
      %v620 = vpack.c.b16 %v568, %v564
      %v621 = vpack.c.b16 %v569, %v565
      %v622 = vpack.c.b16 %v574, %v570
      %v623 = vpack.c.b16 %v575, %v571
      %v624 = vpack.c.b16 %v576, %v572
      %v625 = vpack.c.b16 %v577, %v573
      %v626 = vpack.c.b16 %v582, %v578
      %v627 = vpack.c.b16 %v583, %v579
      %v628 = vpack.c.b16 %v584, %v580
      %v629 = vpack.c.b16 %v585, %v581
      %v630 = vpack.c.b16 %v590, %v586
      %v631 = vpack.c.b16 %v591, %v587
      %v632 = vpack.c.b16 %v592, %v588
      %v633 = vpack.c.b16 %v593, %v589
      %v634 = vpack.c.b16 %v598, %v594
      %v635 = vpack.c.b16 %v599, %v595
      %v636 = vpack.c.b16 %v600, %v596
      %v637 = vpack.c.b16 %v601, %v597
      %v638 = vpack.c.b16 %v606, %v602
      %v639 = vpack.c.b16 %v607, %v603
      %v640 = vpack.c.b16 %v608, %v604
      %v641 = vpack.c.b16 %v609, %v605
      %674 = vmatprep.subr.bf16.mxu0 %v639
      %675 = vmatpush1.bf16.msra.mxu0 %v638
      %676 = vmatprep.subr.bf16.mxu0 %v635
      %677 = vmatpush1.bf16.msra.mxu0 %v634
      %678 = vmatprep.subr.bf16.mxu0 %v631
      %679 = vmatpush1.bf16.msra.mxu0 %v630
      %680 = vmatprep.subr.bf16.mxu0 %v627
      %681 = vmatpush1.bf16.msra.mxu0 %v626
      %682 = vmatprep.subr.bf16.mxu0 %v623
      %683 = vmatpush1.bf16.msra.mxu0 %v622
      %684 = vmatprep.subr.bf16.mxu0 %v619
      %685 = vmatpush1.bf16.msra.mxu0 %v618
      %686 = vmatprep.subr.bf16.mxu0 %v615
      %687 = vmatpush1.bf16.msra.mxu0 %v614
      %688 = vmatprep.subr.bf16.mxu0 %v611
      %689 = vmatpush1.bf16.msra.mxu0 %v610
      %690 = vmatprep.subr.bf16.mxu0 0
      %691 = vmatpush2.bf16.msra.mxu0 0
      %692 = vmatprep.subr.bf16.mxu0 0
      %693 = vmatpush2.bf16.msra.mxu0 0
      %694 = vmatprep.subr.bf16.mxu0 0
      %695 = vmatpush2.bf16.msra.mxu0 0
      %696 = vmatprep.subr.bf16.mxu0 0
      %697 = vmatpush2.bf16.msra.mxu0 0
      %698 = vmatprep.subr.bf16.mxu0 0
      %699 = vmatpush2.bf16.msra.mxu0 0
      %700 = vmatprep.subr.bf16.mxu0 0
      %701 = vmatpush2.bf16.msra.mxu0 0
      %702 = vmatprep.subr.bf16.mxu0 0
      %703 = vmatpush2.bf16.msra.mxu0 0
      %704 = vmatprep.subr.bf16.mxu0 0
      %705 = vmatpush2.bf16.msra.mxu0 0
      %706 = vmatprep.mubr.bf16.mxu0 0
      %707 = vmatmul.mubr.bf16.gmra.mxu0 %v498
      %v708 = vpop.f32.mrf.mxu0
      %v709 = vadd.f32 0.0, %v708
      %v710 = vpop.f32.mrf.mxu0
      %v711 = vadd.f32 0.0, %v710
      %v712 = vpop.f32.mrf.mxu0
      %v713 = vadd.f32 0.0, %v712
      %v714 = vpop.f32.mrf.mxu0
      %v715 = vadd.f32 0.0, %v714
      %716 = vmatprep.mubr.bf16.mxu0 0
      %717 = vmatmul.mubr.bf16.gmra.mxu0 %v499
      %v718 = vpop.f32.mrf.mxu0
      %v719 = vadd.f32 0.0, %v718
      %v720 = vpop.f32.mrf.mxu0
      %v721 = vadd.f32 0.0, %v720
      %v722 = vpop.f32.mrf.mxu0
      %v723 = vadd.f32 0.0, %v722
      %v724 = vpop.f32.mrf.mxu0
      %v725 = vadd.f32 0.0, %v724
      %726 = vmatprep.mubr.bf16.mxu0 0
      %727 = vmatmul.mubr.bf16.gmra.mxu0 %v500
      %v728 = vpop.f32.mrf.mxu0
      %v729 = vadd.f32 0.0, %v728
      %v730 = vpop.f32.mrf.mxu0
      %v731 = vadd.f32 0.0, %v730
      %v732 = vpop.f32.mrf.mxu0
      %v733 = vadd.f32 0.0, %v732
      %v734 = vpop.f32.mrf.mxu0
      %v735 = vadd.f32 0.0, %v734
      %736 = vmatprep.mubr.bf16.mxu0 0
      %737 = vmatmul.mubr.bf16.gmra.mxu0 %v501
      %v738 = vpop.f32.mrf.mxu0
      %v739 = vadd.f32 0.0, %v738
      %v740 = vpop.f32.mrf.mxu0
      %v741 = vadd.f32 0.0, %v740
      %v742 = vpop.f32.mrf.mxu0
      %v743 = vadd.f32 0.0, %v742
      %v744 = vpop.f32.mrf.mxu0
      %v745 = vadd.f32 0.0, %v744
      %746 = vmatprep.mubr.bf16.mxu0 0
      %747 = vmatmul.mubr.bf16.gmra.mxu0 %v502
      %v748 = vpop.f32.mrf.mxu0
      %v749 = vadd.f32 0.0, %v748
      %v750 = vpop.f32.mrf.mxu0
      %v751 = vadd.f32 0.0, %v750
      %v752 = vpop.f32.mrf.mxu0
      %v753 = vadd.f32 0.0, %v752
      %v754 = vpop.f32.mrf.mxu0
      %v755 = vadd.f32 0.0, %v754
      %756 = vmatprep.mubr.bf16.mxu0 0
      %757 = vmatmul.mubr.bf16.gmra.mxu0 %v503
      %v758 = vpop.f32.mrf.mxu0
      %v759 = vadd.f32 0.0, %v758
      %v760 = vpop.f32.mrf.mxu0
      %v761 = vadd.f32 0.0, %v760
      %v762 = vpop.f32.mrf.mxu0
      %v763 = vadd.f32 0.0, %v762
      %v764 = vpop.f32.mrf.mxu0
      %v765 = vadd.f32 0.0, %v764
      %766 = vmatprep.mubr.bf16.mxu0 0
      %767 = vmatmul.mubr.bf16.gmra.mxu0 %v504
      %v768 = vpop.f32.mrf.mxu0
      %v769 = vadd.f32 0.0, %v768
      %v770 = vpop.f32.mrf.mxu0
      %v771 = vadd.f32 0.0, %v770
      %v772 = vpop.f32.mrf.mxu0
      %v773 = vadd.f32 0.0, %v772
      %v774 = vpop.f32.mrf.mxu0
      %v775 = vadd.f32 0.0, %v774
      %776 = vmatprep.mubr.bf16.mxu0 0
      %777 = vmatmul.mubr.bf16.gmra.mxu0 %v505
      %v778 = vpop.f32.mrf.mxu0
      %v779 = vadd.f32 0.0, %v778
      %v780 = vpop.f32.mrf.mxu0
      %v781 = vadd.f32 0.0, %v780
      %v782 = vpop.f32.mrf.mxu0
      %v783 = vadd.f32 0.0, %v782
      %v784 = vpop.f32.mrf.mxu0
      %v785 = vadd.f32 0.0, %v784
      %786 = vdwg.mxu0
      %787 = vmatprep.subr.bf16.mxu0 %v641
      %788 = vmatpush1.bf16.msra.mxu0 %v640
      %789 = vmatprep.subr.bf16.mxu0 %v637
      %790 = vmatpush1.bf16.msra.mxu0 %v636
      %791 = vmatprep.subr.bf16.mxu0 %v633
      %792 = vmatpush1.bf16.msra.mxu0 %v632
      %793 = vmatprep.subr.bf16.mxu0 %v629
      %794 = vmatpush1.bf16.msra.mxu0 %v628
      %795 = vmatprep.subr.bf16.mxu0 %v625
      %796 = vmatpush1.bf16.msra.mxu0 %v624
      %797 = vmatprep.subr.bf16.mxu0 %v621
      %798 = vmatpush1.bf16.msra.mxu0 %v620
      %799 = vmatprep.subr.bf16.mxu0 %v617
      %800 = vmatpush1.bf16.msra.mxu0 %v616
      %801 = vmatprep.subr.bf16.mxu0 %v613
      %802 = vmatpush1.bf16.msra.mxu0 %v612
      %803 = vmatprep.subr.bf16.mxu0 0
      %804 = vmatpush2.bf16.msra.mxu0 0
      %805 = vmatprep.subr.bf16.mxu0 0
      %806 = vmatpush2.bf16.msra.mxu0 0
      %807 = vmatprep.subr.bf16.mxu0 0
      %808 = vmatpush2.bf16.msra.mxu0 0
      %809 = vmatprep.subr.bf16.mxu0 0
      %810 = vmatpush2.bf16.msra.mxu0 0
      %811 = vmatprep.subr.bf16.mxu0 0
      %812 = vmatpush2.bf16.msra.mxu0 0
      %813 = vmatprep.subr.bf16.mxu0 0
      %814 = vmatpush2.bf16.msra.mxu0 0
      %815 = vmatprep.subr.bf16.mxu0 0
      %816 = vmatpush2.bf16.msra.mxu0 0
      %817 = vmatprep.subr.bf16.mxu0 0
      %818 = vmatpush2.bf16.msra.mxu0 0
      %819 = vmatprep.mubr.bf16.mxu0 0
      %820 = vmatmul.mubr.bf16.gmra.mxu0 %v498
      %v821 = vpop.f32.mrf.mxu0
      %v822 = vadd.f32 0.0, %v821
      %v823 = vpop.f32.mrf.mxu0
      %v824 = vadd.f32 0.0, %v823
      %v825 = vpop.f32.mrf.mxu0
      %v826 = vadd.f32 0.0, %v825
      %v827 = vpop.f32.mrf.mxu0
      %v828 = vadd.f32 0.0, %v827
      %829 = vmatprep.mubr.bf16.mxu0 0
      %830 = vmatmul.mubr.bf16.gmra.mxu0 %v499
      %v831 = vpop.f32.mrf.mxu0
      %v832 = vadd.f32 0.0, %v831
      %v833 = vpop.f32.mrf.mxu0
      %v834 = vadd.f32 0.0, %v833
      %v835 = vpop.f32.mrf.mxu0
      %v836 = vadd.f32 0.0, %v835
      %v837 = vpop.f32.mrf.mxu0
      %v838 = vadd.f32 0.0, %v837
      %839 = vmatprep.mubr.bf16.mxu0 0
      %840 = vmatmul.mubr.bf16.gmra.mxu0 %v500
      %v841 = vpop.f32.mrf.mxu0
      %v842 = vadd.f32 0.0, %v841
      %v843 = vpop.f32.mrf.mxu0
      %v844 = vadd.f32 0.0, %v843
      %v845 = vpop.f32.mrf.mxu0
      %v846 = vadd.f32 0.0, %v845
      %v847 = vpop.f32.mrf.mxu0
      %v848 = vadd.f32 0.0, %v847
      %849 = vmatprep.mubr.bf16.mxu0 0
      %850 = vmatmul.mubr.bf16.gmra.mxu0 %v501
      %v851 = vpop.f32.mrf.mxu0
      %v852 = vadd.f32 0.0, %v851
      %v853 = vpop.f32.mrf.mxu0
      %v854 = vadd.f32 0.0, %v853
      %v855 = vpop.f32.mrf.mxu0
      %v856 = vadd.f32 0.0, %v855
      %v857 = vpop.f32.mrf.mxu0
      %v858 = vadd.f32 0.0, %v857
      %859 = vmatprep.mubr.bf16.mxu0 0
      %860 = vmatmul.mubr.bf16.gmra.mxu0 %v502
      %v861 = vpop.f32.mrf.mxu0
      %v862 = vadd.f32 0.0, %v861
      %v863 = vpop.f32.mrf.mxu0
      %v864 = vadd.f32 0.0, %v863
      %v865 = vpop.f32.mrf.mxu0
      %v866 = vadd.f32 0.0, %v865
      %v867 = vpop.f32.mrf.mxu0
      %v868 = vadd.f32 0.0, %v867
      %869 = vmatprep.mubr.bf16.mxu0 0
      %870 = vmatmul.mubr.bf16.gmra.mxu0 %v503
      %v871 = vpop.f32.mrf.mxu0
      %v872 = vadd.f32 0.0, %v871
      %v873 = vpop.f32.mrf.mxu0
      %v874 = vadd.f32 0.0, %v873
      %v875 = vpop.f32.mrf.mxu0
      %v876 = vadd.f32 0.0, %v875
      %v877 = vpop.f32.mrf.mxu0
      %v878 = vadd.f32 0.0, %v877
      %879 = vmatprep.mubr.bf16.mxu0 0
      %880 = vmatmul.mubr.bf16.gmra.mxu0 %v504
      %v881 = vpop.f32.mrf.mxu0
      %v882 = vadd.f32 0.0, %v881
      %v883 = vpop.f32.mrf.mxu0
      %v884 = vadd.f32 0.0, %v883
      %v885 = vpop.f32.mrf.mxu0
      %v886 = vadd.f32 0.0, %v885
      %v887 = vpop.f32.mrf.mxu0
      %v888 = vadd.f32 0.0, %v887
      %889 = vmatprep.mubr.bf16.mxu0 0
      %890 = vmatmul.mubr.bf16.gmra.mxu0 %v505
      %v891 = vpop.f32.mrf.mxu0
      %v892 = vadd.f32 0.0, %v891
      %v893 = vpop.f32.mrf.mxu0
      %v894 = vadd.f32 0.0, %v893
      %v895 = vpop.f32.mrf.mxu0
      %v896 = vadd.f32 0.0, %v895
      %v897 = vpop.f32.mrf.mxu0
      %v898 = vadd.f32 0.0, %v897
      %899 = vdwg.mxu0
      %v900 = vld [vmem:[%s3] sm:$0xf]
      %v902 = vlaneseq
      %v903 = vshrl.u32 %v902, 7
      %v904 = vsub.s32 0, %v903
      %v905 = vrot.slane %v900, %v904
      %v906 = vlaneseq
      %v907 = vshrl.u32 %v906, 7
      %v908 = vsub.s32 1, %v907
      %v909 = vrot.slane %v900, %v908
      %v910 = vlaneseq
      %v911 = vshrl.u32 %v910, 7
      %v912 = vsub.s32 2, %v911
      %v913 = vrot.slane %v900, %v912
      %v914 = vlaneseq
      %v915 = vshrl.u32 %v914, 7
      %v916 = vsub.s32 3, %v915
      %v917 = vrot.slane %v900, %v916
      %v922 = vmul.f32 %v709, %v905
      %v923 = vmul.f32 %v711, %v909
      %v924 = vmul.f32 %v822, %v913
      %v925 = vmul.f32 %v824, %v917
      %v926 = vmul.f32 %v713, %v905
      %v927 = vmul.f32 %v715, %v909
      %v928 = vmul.f32 %v826, %v913
      %v929 = vmul.f32 %v828, %v917
      %v930 = vmul.f32 %v719, %v905
      %v931 = vmul.f32 %v721, %v909
      %v932 = vmul.f32 %v832, %v913
      %v933 = vmul.f32 %v834, %v917
      %v934 = vmul.f32 %v723, %v905
      %v935 = vmul.f32 %v725, %v909
      %v936 = vmul.f32 %v836, %v913
      %v937 = vmul.f32 %v838, %v917
      %v938 = vmul.f32 %v729, %v905
      %v939 = vmul.f32 %v731, %v909
      %v940 = vmul.f32 %v842, %v913
      %v941 = vmul.f32 %v844, %v917
      %v942 = vmul.f32 %v733, %v905
      %v943 = vmul.f32 %v735, %v909
      %v944 = vmul.f32 %v846, %v913
      %v945 = vmul.f32 %v848, %v917
      %v946 = vmul.f32 %v739, %v905
      %v947 = vmul.f32 %v741, %v909
      %v948 = vmul.f32 %v852, %v913
      %v949 = vmul.f32 %v854, %v917
      %v950 = vmul.f32 %v743, %v905
      %v951 = vmul.f32 %v745, %v909
      %v952 = vmul.f32 %v856, %v913
      %v953 = vmul.f32 %v858, %v917
      %v954 = vmul.f32 %v749, %v905
      %v955 = vmul.f32 %v751, %v909
      %v956 = vmul.f32 %v862, %v913
      %v957 = vmul.f32 %v864, %v917
      %v958 = vmul.f32 %v753, %v905
      %v959 = vmul.f32 %v755, %v909
      %v960 = vmul.f32 %v866, %v913
      %v961 = vmul.f32 %v868, %v917
      %v962 = vmul.f32 %v759, %v905
      %v963 = vmul.f32 %v761, %v909
      %v964 = vmul.f32 %v872, %v913
      %v965 = vmul.f32 %v874, %v917
      %v966 = vmul.f32 %v763, %v905
      %v967 = vmul.f32 %v765, %v909
      %v968 = vmul.f32 %v876, %v913
      %v969 = vmul.f32 %v878, %v917
      %v970 = vmul.f32 %v769, %v905
      %v971 = vmul.f32 %v771, %v909
      %v972 = vmul.f32 %v882, %v913
      %v973 = vmul.f32 %v884, %v917
      %v974 = vmul.f32 %v773, %v905
      %v975 = vmul.f32 %v775, %v909
      %v976 = vmul.f32 %v886, %v913
      %v977 = vmul.f32 %v888, %v917
      %v978 = vmul.f32 %v779, %v905
      %v979 = vmul.f32 %v781, %v909
      %v980 = vmul.f32 %v892, %v913
      %v981 = vmul.f32 %v894, %v917
      %v982 = vmul.f32 %v783, %v905
      %v983 = vmul.f32 %v785, %v909
      %v984 = vmul.f32 %v896, %v913
      %v985 = vmul.f32 %v898, %v917
      %v986 = vld [vmem:[#allocation9] sm:$0xf]
      %v988 = vlaneseq
      %v989 = vshrl.u32 %v988, 7
      %v990 = vsub.s32 0, %v989
      %v991 = vrot.slane %v986, %v990
      %v992 = vlaneseq
      %v993 = vshrl.u32 %v992, 7
      %v994 = vsub.s32 1, %v993
      %v995 = vrot.slane %v986, %v994
      %v996 = vlaneseq
      %v997 = vshrl.u32 %v996, 7
      %v998 = vsub.s32 2, %v997
      %v999 = vrot.slane %v986, %v998
      %v1000 = vlaneseq
      %v1001 = vshrl.u32 %v1000, 7
      %v1002 = vsub.s32 3, %v1001
      %v1003 = vrot.slane %v986, %v1002
      %v1008 = vadd.f32 %v922, %v991
      %v1009 = vadd.f32 %v923, %v995
      %v1010 = vadd.f32 %v924, %v999
      %v1011 = vadd.f32 %v925, %v1003
      %v1012 = vadd.f32 %v926, %v991
      %v1013 = vadd.f32 %v927, %v995
      %v1014 = vadd.f32 %v928, %v999
      %v1015 = vadd.f32 %v929, %v1003
      %v1016 = vadd.f32 %v930, %v991
      %v1017 = vadd.f32 %v931, %v995
      %v1018 = vadd.f32 %v932, %v999
      %v1019 = vadd.f32 %v933, %v1003
      %v1020 = vadd.f32 %v934, %v991
      %v1021 = vadd.f32 %v935, %v995
      %v1022 = vadd.f32 %v936, %v999
      %v1023 = vadd.f32 %v937, %v1003
      %v1024 = vadd.f32 %v938, %v991
      %v1025 = vadd.f32 %v939, %v995
      %v1026 = vadd.f32 %v940, %v999
      %v1027 = vadd.f32 %v941, %v1003
      %v1028 = vadd.f32 %v942, %v991
      %v1029 = vadd.f32 %v943, %v995
      %v1030 = vadd.f32 %v944, %v999
      %v1031 = vadd.f32 %v945, %v1003
      %v1032 = vadd.f32 %v946, %v991
      %v1033 = vadd.f32 %v947, %v995
      %v1034 = vadd.f32 %v948, %v999
      %v1035 = vadd.f32 %v949, %v1003
      %v1036 = vadd.f32 %v950, %v991
      %v1037 = vadd.f32 %v951, %v995
      %v1038 = vadd.f32 %v952, %v999
      %v1039 = vadd.f32 %v953, %v1003
      %v1040 = vadd.f32 %v954, %v991
      %v1041 = vadd.f32 %v955, %v995
      %v1042 = vadd.f32 %v956, %v999
      %v1043 = vadd.f32 %v957, %v1003
      %v1044 = vadd.f32 %v958, %v991
      %v1045 = vadd.f32 %v959, %v995
      %v1046 = vadd.f32 %v960, %v999
      %v1047 = vadd.f32 %v961, %v1003
      %v1048 = vadd.f32 %v962, %v991
      %v1049 = vadd.f32 %v963, %v995
      %v1050 = vadd.f32 %v964, %v999
      %v1051 = vadd.f32 %v965, %v1003
      %v1052 = vadd.f32 %v966, %v991
      %v1053 = vadd.f32 %v967, %v995
      %v1054 = vadd.f32 %v968, %v999
      %v1055 = vadd.f32 %v969, %v1003
      %v1056 = vadd.f32 %v970, %v991
      %v1057 = vadd.f32 %v971, %v995
      %v1058 = vadd.f32 %v972, %v999
      %v1059 = vadd.f32 %v973, %v1003
      %v1060 = vadd.f32 %v974, %v991
      %v1061 = vadd.f32 %v975, %v995
      %v1062 = vadd.f32 %v976, %v999
      %v1063 = vadd.f32 %v977, %v1003
      %v1064 = vadd.f32 %v978, %v991
      %v1065 = vadd.f32 %v979, %v995
      %v1066 = vadd.f32 %v980, %v999
      %v1067 = vadd.f32 %v981, %v1003
      %v1068 = vadd.f32 %v982, %v991
      %v1069 = vadd.f32 %v983, %v995
      %v1070 = vadd.f32 %v984, %v999
      %v1071 = vadd.f32 %v985, %v1003
      %v1072 = vmax.f32 %v1008, 0.0
      %v1073 = vmax.f32 %v1009, 0.0
      %v1074 = vmax.f32 %v1010, 0.0
      %v1075 = vmax.f32 %v1011, 0.0
      %v1076 = vmax.f32 %v1012, 0.0
      %v1077 = vmax.f32 %v1013, 0.0
      %v1078 = vmax.f32 %v1014, 0.0
      %v1079 = vmax.f32 %v1015, 0.0
      %v1080 = vmax.f32 %v1016, 0.0
      %v1081 = vmax.f32 %v1017, 0.0
      %v1082 = vmax.f32 %v1018, 0.0
      %v1083 = vmax.f32 %v1019, 0.0
      %v1084 = vmax.f32 %v1020, 0.0
      %v1085 = vmax.f32 %v1021, 0.0
      %v1086 = vmax.f32 %v1022, 0.0
      %v1087 = vmax.f32 %v1023, 0.0
      %v1088 = vmax.f32 %v1024, 0.0
      %v1089 = vmax.f32 %v1025, 0.0
      %v1090 = vmax.f32 %v1026, 0.0
      %v1091 = vmax.f32 %v1027, 0.0
      %v1092 = vmax.f32 %v1028, 0.0
      %v1093 = vmax.f32 %v1029, 0.0
      %v1094 = vmax.f32 %v1030, 0.0
      %v1095 = vmax.f32 %v1031, 0.0
      %v1096 = vmax.f32 %v1032, 0.0
      %v1097 = vmax.f32 %v1033, 0.0
      %v1098 = vmax.f32 %v1034, 0.0
      %v1099 = vmax.f32 %v1035, 0.0
      %v1100 = vmax.f32 %v1036, 0.0
      %v1101 = vmax.f32 %v1037, 0.0
      %v1102 = vmax.f32 %v1038, 0.0
      %v1103 = vmax.f32 %v1039, 0.0
      %v1104 = vmax.f32 %v1040, 0.0
      %v1105 = vmax.f32 %v1041, 0.0
      %v1106 = vmax.f32 %v1042, 0.0
      %v1107 = vmax.f32 %v1043, 0.0
      %v1108 = vmax.f32 %v1044, 0.0
      %v1109 = vmax.f32 %v1045, 0.0
      %v1110 = vmax.f32 %v1046, 0.0
      %v1111 = vmax.f32 %v1047, 0.0
      %v1112 = vmax.f32 %v1048, 0.0
      %v1113 = vmax.f32 %v1049, 0.0
      %v1114 = vmax.f32 %v1050, 0.0
      %v1115 = vmax.f32 %v1051, 0.0
      %v1116 = vmax.f32 %v1052, 0.0
      %v1117 = vmax.f32 %v1053, 0.0
      %v1118 = vmax.f32 %v1054, 0.0
      %v1119 = vmax.f32 %v1055, 0.0
      %v1120 = vmax.f32 %v1056, 0.0
      %v1121 = vmax.f32 %v1057, 0.0
      %v1122 = vmax.f32 %v1058, 0.0
      %v1123 = vmax.f32 %v1059, 0.0
      %v1124 = vmax.f32 %v1060, 0.0
      %v1125 = vmax.f32 %v1061, 0.0
      %v1126 = vmax.f32 %v1062, 0.0
      %v1127 = vmax.f32 %v1063, 0.0
      %v1128 = vmax.f32 %v1064, 0.0
      %v1129 = vmax.f32 %v1065, 0.0
      %v1130 = vmax.f32 %v1066, 0.0
      %v1131 = vmax.f32 %v1067, 0.0
      %v1132 = vmax.f32 %v1068, 0.0
      %v1133 = vmax.f32 %v1069, 0.0
      %v1134 = vmax.f32 %v1070, 0.0
      %v1135 = vmax.f32 %v1071, 0.0
      %v1136 = vpack.c.bf16 %v1076, %v1072
      %v1137 = vpack.c.bf16 %v1077, %v1073
      %v1138 = vpack.c.bf16 %v1078, %v1074
      %v1139 = vpack.c.bf16 %v1079, %v1075
      %v1140 = vpack.c.bf16 %v1084, %v1080
      %v1141 = vpack.c.bf16 %v1085, %v1081
      %v1142 = vpack.c.bf16 %v1086, %v1082
      %v1143 = vpack.c.bf16 %v1087, %v1083
      %v1144 = vpack.c.bf16 %v1092, %v1088
      %v1145 = vpack.c.bf16 %v1093, %v1089
      %v1146 = vpack.c.bf16 %v1094, %v1090
      %v1147 = vpack.c.bf16 %v1095, %v1091
      %v1148 = vpack.c.bf16 %v1100, %v1096
      %v1149 = vpack.c.bf16 %v1101, %v1097
      %v1150 = vpack.c.bf16 %v1102, %v1098
      %v1151 = vpack.c.bf16 %v1103, %v1099
      %v1152 = vpack.c.bf16 %v1108, %v1104
      %v1153 = vpack.c.bf16 %v1109, %v1105
      %v1154 = vpack.c.bf16 %v1110, %v1106
      %v1155 = vpack.c.bf16 %v1111, %v1107
      %v1156 = vpack.c.bf16 %v1116, %v1112
      %v1157 = vpack.c.bf16 %v1117, %v1113
      %v1158 = vpack.c.bf16 %v1118, %v1114
      %v1159 = vpack.c.bf16 %v1119, %v1115
      %v1160 = vpack.c.bf16 %v1124, %v1120
      %v1161 = vpack.c.bf16 %v1125, %v1121
      %v1162 = vpack.c.bf16 %v1126, %v1122
      %v1163 = vpack.c.bf16 %v1127, %v1123
      %v1164 = vpack.c.bf16 %v1132, %v1128
      %v1165 = vpack.c.bf16 %v1133, %v1129
      %v1166 = vpack.c.bf16 %v1134, %v1130
      %v1167 = vpack.c.bf16 %v1135, %v1131
      %v1168 = vld [vmem:[#allocation11] sm:$0xf]
      %v1169 = vld [vmem:[#allocation11 + $0x4] sm:$0xf]
      %v1170 = vld [vmem:[#allocation11 + $0x8] sm:$0xf]
      %v1171 = vld [vmem:[#allocation11 + $0xc] sm:$0xf]
      %v1172 = vld [vmem:[#allocation11 + $0x10] sm:$0xf]
      %v1173 = vld [vmem:[#allocation11 + $0x14] sm:$0xf]
      %v1174 = vld [vmem:[#allocation11 + $0x18] sm:$0xf]
      %v1175 = vld [vmem:[#allocation11 + $0x1c] sm:$0xf]
      %v1176 = vld [vmem:[#allocation11 + $0x20] sm:$0xf]
      %v1177 = vld [vmem:[#allocation11 + $0x24] sm:$0xf]
      %v1178 = vld [vmem:[#allocation11 + $0x28] sm:$0xf]
      %v1179 = vld [vmem:[#allocation11 + $0x2c] sm:$0xf]
      %v1180 = vld [vmem:[#allocation11 + $0x30] sm:$0xf]
      %v1181 = vld [vmem:[#allocation11 + $0x34] sm:$0xf]
      %v1182 = vld [vmem:[#allocation11 + $0x38] sm:$0xf]
      %v1183 = vld [vmem:[#allocation11 + $0x3c] sm:$0xf]
      %v1184 = vld [vmem:[#allocation11 + $0x40] sm:$0xf]
      %v1185 = vld [vmem:[#allocation11 + $0x44] sm:$0xf]
      %v1186 = vld [vmem:[#allocation11 + $0x48] sm:$0xf]
      %v1187 = vld [vmem:[#allocation11 + $0x4c] sm:$0xf]
      %v1188 = vld [vmem:[#allocation11 + $0x50] sm:$0xf]
      %v1189 = vld [vmem:[#allocation11 + $0x54] sm:$0xf]
      %v1190 = vld [vmem:[#allocation11 + $0x58] sm:$0xf]
      %v1191 = vld [vmem:[#allocation11 + $0x5c] sm:$0xf]
      %v1192 = vld [vmem:[#allocation11 + $0x60] sm:$0xf]
      %v1193 = vld [vmem:[#allocation11 + $0x64] sm:$0xf]
      %v1194 = vld [vmem:[#allocation11 + $0x68] sm:$0xf]
      %v1195 = vld [vmem:[#allocation11 + $0x6c] sm:$0xf]
      %v1196 = vld [vmem:[#allocation11 + $0x70] sm:$0xf]
      %v1197 = vld [vmem:[#allocation11 + $0x74] sm:$0xf]
      %v1198 = vld [vmem:[#allocation11 + $0x78] sm:$0xf]
      %v1199 = vld [vmem:[#allocation11 + $0x7c] sm:$0xf]
      %v1200 = vld [vmem:[#allocation11 + $0x80] sm:$0xf]
      %v1201 = vld [vmem:[#allocation11 + $0x84] sm:$0xf]
      %v1202 = vld [vmem:[#allocation11 + $0x88] sm:$0xf]
      %v1203 = vld [vmem:[#allocation11 + $0x8c] sm:$0xf]
      %v1204 = vld [vmem:[#allocation11 + $0x90] sm:$0xf]
      %v1205 = vld [vmem:[#allocation11 + $0x94] sm:$0xf]
      %v1206 = vld [vmem:[#allocation11 + $0x98] sm:$0xf]
      %v1207 = vld [vmem:[#allocation11 + $0x9c] sm:$0xf]
      %v1208 = vld [vmem:[#allocation11 + $0xa0] sm:$0xf]
      %v1209 = vld [vmem:[#allocation11 + $0xa4] sm:$0xf]
      %v1210 = vld [vmem:[#allocation11 + $0xa8] sm:$0xf]
      %v1211 = vld [vmem:[#allocation11 + $0xac] sm:$0xf]
      %v1212 = vld [vmem:[#allocation11 + $0xb0] sm:$0xf]
      %v1213 = vld [vmem:[#allocation11 + $0xb4] sm:$0xf]
      %v1214 = vld [vmem:[#allocation11 + $0xb8] sm:$0xf]
      %v1215 = vld [vmem:[#allocation11 + $0xbc] sm:$0xf]
      %v1216 = vld [vmem:[#allocation11 + $0xc0] sm:$0xf]
      %v1217 = vld [vmem:[#allocation11 + $0xc4] sm:$0xf]
      %v1218 = vld [vmem:[#allocation11 + $0xc8] sm:$0xf]
      %v1219 = vld [vmem:[#allocation11 + $0xcc] sm:$0xf]
      %v1220 = vld [vmem:[#allocation11 + $0xd0] sm:$0xf]
      %v1221 = vld [vmem:[#allocation11 + $0xd4] sm:$0xf]
      %v1222 = vld [vmem:[#allocation11 + $0xd8] sm:$0xf]
      %v1223 = vld [vmem:[#allocation11 + $0xdc] sm:$0xf]
      %v1224 = vld [vmem:[#allocation11 + $0xe0] sm:$0xf]
      %v1225 = vld [vmem:[#allocation11 + $0xe4] sm:$0xf]
      %v1226 = vld [vmem:[#allocation11 + $0xe8] sm:$0xf]
      %v1227 = vld [vmem:[#allocation11 + $0xec] sm:$0xf]
      %v1228 = vld [vmem:[#allocation11 + $0xf0] sm:$0xf]
      %v1229 = vld [vmem:[#allocation11 + $0xf4] sm:$0xf]
      %v1230 = vld [vmem:[#allocation11 + $0xf8] sm:$0xf]
      %v1231 = vld [vmem:[#allocation11 + $0xfc] sm:$0xf]
      %v1296 = vunpack.c.l.b16 %v1168
      %v1297 = vunpack.c.l.b16 %v1169
      %v1298 = vunpack.c.l.b16 %v1170
      %v1299 = vunpack.c.l.b16 %v1171
      %v1300 = vunpack.c.l.b16 %v1172
      %v1301 = vunpack.c.l.b16 %v1173
      %v1302 = vunpack.c.l.b16 %v1174
      %v1303 = vunpack.c.l.b16 %v1175
      %v1304 = vunpack.c.l.b16 %v1176
      %v1305 = vunpack.c.l.b16 %v1177
      %v1306 = vunpack.c.l.b16 %v1178
      %v1307 = vunpack.c.l.b16 %v1179
      %v1308 = vunpack.c.l.b16 %v1180
      %v1309 = vunpack.c.l.b16 %v1181
      %v1310 = vunpack.c.l.b16 %v1182
      %v1311 = vunpack.c.l.b16 %v1183
      %v1312 = vunpack.c.l.b16 %v1184
      %v1313 = vunpack.c.l.b16 %v1185
      %v1314 = vunpack.c.l.b16 %v1186
      %v1315 = vunpack.c.l.b16 %v1187
      %v1316 = vunpack.c.l.b16 %v1188
      %v1317 = vunpack.c.l.b16 %v1189
      %v1318 = vunpack.c.l.b16 %v1190
      %v1319 = vunpack.c.l.b16 %v1191
      %v1320 = vunpack.c.l.b16 %v1192
      %v1321 = vunpack.c.l.b16 %v1193
      %v1322 = vunpack.c.l.b16 %v1194
      %v1323 = vunpack.c.l.b16 %v1195
      %v1324 = vunpack.c.l.b16 %v1196
      %v1325 = vunpack.c.l.b16 %v1197
      %v1326 = vunpack.c.l.b16 %v1198
      %v1327 = vunpack.c.l.b16 %v1199
      %v1328 = vunpack.c.l.b16 %v1200
      %v1329 = vunpack.c.l.b16 %v1201
      %v1330 = vunpack.c.l.b16 %v1202
      %v1331 = vunpack.c.l.b16 %v1203
      %v1332 = vunpack.c.l.b16 %v1204
      %v1333 = vunpack.c.l.b16 %v1205
      %v1334 = vunpack.c.l.b16 %v1206
      %v1335 = vunpack.c.l.b16 %v1207
      %v1336 = vunpack.c.l.b16 %v1208
      %v1337 = vunpack.c.l.b16 %v1209
      %v1338 = vunpack.c.l.b16 %v1210
      %v1339 = vunpack.c.l.b16 %v1211
      %v1340 = vunpack.c.l.b16 %v1212
      %v1341 = vunpack.c.l.b16 %v1213
      %v1342 = vunpack.c.l.b16 %v1214
      %v1343 = vunpack.c.l.b16 %v1215
      %v1344 = vunpack.c.l.b16 %v1216
      %v1345 = vunpack.c.l.b16 %v1217
      %v1346 = vunpack.c.l.b16 %v1218
      %v1347 = vunpack.c.l.b16 %v1219
      %v1348 = vunpack.c.l.b16 %v1220
      %v1349 = vunpack.c.l.b16 %v1221
      %v1350 = vunpack.c.l.b16 %v1222
      %v1351 = vunpack.c.l.b16 %v1223
      %v1352 = vunpack.c.l.b16 %v1224
      %v1353 = vunpack.c.l.b16 %v1225
      %v1354 = vunpack.c.l.b16 %v1226
      %v1355 = vunpack.c.l.b16 %v1227
      %v1356 = vunpack.c.l.b16 %v1228
      %v1357 = vunpack.c.l.b16 %v1229
      %v1358 = vunpack.c.l.b16 %v1230
      %v1359 = vunpack.c.l.b16 %v1231
      %v1360 = vpack.c.b16 %v1297, %v1296
      %v1361 = vpack.c.b16 %v1299, %v1298
      %v1362 = vpack.c.b16 %v1301, %v1300
      %v1363 = vpack.c.b16 %v1303, %v1302
      %v1364 = vpack.c.b16 %v1305, %v1304
      %v1365 = vpack.c.b16 %v1307, %v1306
      %v1366 = vpack.c.b16 %v1309, %v1308
      %v1367 = vpack.c.b16 %v1311, %v1310
      %v1368 = vpack.c.b16 %v1313, %v1312
      %v1369 = vpack.c.b16 %v1315, %v1314
      %v1370 = vpack.c.b16 %v1317, %v1316
      %v1371 = vpack.c.b16 %v1319, %v1318
      %v1372 = vpack.c.b16 %v1321, %v1320
      %v1373 = vpack.c.b16 %v1323, %v1322
      %v1374 = vpack.c.b16 %v1325, %v1324
      %v1375 = vpack.c.b16 %v1327, %v1326
      %v1376 = vpack.c.b16 %v1329, %v1328
      %v1377 = vpack.c.b16 %v1331, %v1330
      %v1378 = vpack.c.b16 %v1333, %v1332
      %v1379 = vpack.c.b16 %v1335, %v1334
      %v1380 = vpack.c.b16 %v1337, %v1336
      %v1381 = vpack.c.b16 %v1339, %v1338
      %v1382 = vpack.c.b16 %v1341, %v1340
      %v1383 = vpack.c.b16 %v1343, %v1342
      %v1384 = vpack.c.b16 %v1345, %v1344
      %v1385 = vpack.c.b16 %v1347, %v1346
      %v1386 = vpack.c.b16 %v1349, %v1348
      %v1387 = vpack.c.b16 %v1351, %v1350
      %v1388 = vpack.c.b16 %v1353, %v1352
      %v1389 = vpack.c.b16 %v1355, %v1354
      %v1390 = vpack.c.b16 %v1357, %v1356
      %v1391 = vpack.c.b16 %v1359, %v1358
      %1424 = vmatprep.subr.bf16.mxu0 0
      %1425 = vmatpush1.bf16.msra.mxu0 %v1367
      %1426 = vmatprep.subr.bf16.mxu0 0
      %1427 = vmatpush1.bf16.msra.mxu0 %v1366
      %1428 = vmatprep.subr.bf16.mxu0 0
      %1429 = vmatpush1.bf16.msra.mxu0 %v1365
      %1430 = vmatprep.subr.bf16.mxu0 0
      %1431 = vmatpush1.bf16.msra.mxu0 %v1364
      %1432 = vmatprep.subr.bf16.mxu0 0
      %1433 = vmatpush1.bf16.msra.mxu0 %v1363
      %1434 = vmatprep.subr.bf16.mxu0 0
      %1435 = vmatpush1.bf16.msra.mxu0 %v1362
      %1436 = vmatprep.subr.bf16.mxu0 0
      %1437 = vmatpush1.bf16.msra.mxu0 %v1361
      %1438 = vmatprep.subr.bf16.mxu0 0
      %1439 = vmatpush1.bf16.msra.mxu0 %v1360
      %1440 = vmatprep.subr.bf16.mxu0 0
      %1441 = vmatpush2.bf16.msra.mxu0 %v1375
      %1442 = vmatprep.subr.bf16.mxu0 0
      %1443 = vmatpush2.bf16.msra.mxu0 %v1374
      %1444 = vmatprep.subr.bf16.mxu0 0
      %1445 = vmatpush2.bf16.msra.mxu0 %v1373
      %1446 = vmatprep.subr.bf16.mxu0 0
      %1447 = vmatpush2.bf16.msra.mxu0 %v1372
      %1448 = vmatprep.subr.bf16.mxu0 0
      %1449 = vmatpush2.bf16.msra.mxu0 %v1371
      %1450 = vmatprep.subr.bf16.mxu0 0
      %1451 = vmatpush2.bf16.msra.mxu0 %v1370
      %1452 = vmatprep.subr.bf16.mxu0 0
      %1453 = vmatpush2.bf16.msra.mxu0 %v1369
      %1454 = vmatprep.subr.bf16.mxu0 0
      %1455 = vmatpush2.bf16.msra.mxu0 %v1368
      %1456 = vmatprep.mubr.bf16.mxu0 %v1137
      %1457 = vmatmul.mubr.bf16.gmra.mxu0 %v1136
      %v1458 = vpop.f32.mrf.mxu0
      %v1459 = vadd.f32 0.0, %v1458
      %v1460 = vpop.f32.mrf.mxu0
      %v1461 = vpop.f32.mrf.mxu0
      %v1462 = vadd.f32 0.0, %v1461
      %v1463 = vpop.f32.mrf.mxu0
      %1464 = vmatprep.mubr.bf16.mxu0 %v1141
      %1465 = vmatmul.mubr.bf16.gmra.mxu0 %v1140
      %v1466 = vpop.f32.mrf.mxu0
      %v1467 = vadd.f32 0.0, %v1466
      %v1468 = vpop.f32.mrf.mxu0
      %v1469 = vpop.f32.mrf.mxu0
      %v1470 = vadd.f32 0.0, %v1469
      %v1471 = vpop.f32.mrf.mxu0
      %1472 = vmatprep.mubr.bf16.mxu0 %v1145
      %1473 = vmatmul.mubr.bf16.gmra.mxu0 %v1144
      %v1474 = vpop.f32.mrf.mxu0
      %v1475 = vadd.f32 0.0, %v1474
      %v1476 = vpop.f32.mrf.mxu0
      %v1477 = vpop.f32.mrf.mxu0
      %v1478 = vadd.f32 0.0, %v1477
      %v1479 = vpop.f32.mrf.mxu0
      %1480 = vmatprep.mubr.bf16.mxu0 %v1149
      %1481 = vmatmul.mubr.bf16.gmra.mxu0 %v1148
      %v1482 = vpop.f32.mrf.mxu0
      %v1483 = vadd.f32 0.0, %v1482
      %v1484 = vpop.f32.mrf.mxu0
      %v1485 = vpop.f32.mrf.mxu0
      %v1486 = vadd.f32 0.0, %v1485
      %v1487 = vpop.f32.mrf.mxu0
      %1488 = vmatprep.mubr.bf16.mxu0 %v1153
      %1489 = vmatmul.mubr.bf16.gmra.mxu0 %v1152
      %v1490 = vpop.f32.mrf.mxu0
      %v1491 = vadd.f32 0.0, %v1490
      %v1492 = vpop.f32.mrf.mxu0
      %v1493 = vpop.f32.mrf.mxu0
      %v1494 = vadd.f32 0.0, %v1493
      %v1495 = vpop.f32.mrf.mxu0
      %1496 = vmatprep.mubr.bf16.mxu0 %v1157
      %1497 = vmatmul.mubr.bf16.gmra.mxu0 %v1156
      %v1498 = vpop.f32.mrf.mxu0
      %v1499 = vadd.f32 0.0, %v1498
      %v1500 = vpop.f32.mrf.mxu0
      %v1501 = vpop.f32.mrf.mxu0
      %v1502 = vadd.f32 0.0, %v1501
      %v1503 = vpop.f32.mrf.mxu0
      %1504 = vmatprep.mubr.bf16.mxu0 %v1161
      %1505 = vmatmul.mubr.bf16.gmra.mxu0 %v1160
      %v1506 = vpop.f32.mrf.mxu0
      %v1507 = vadd.f32 0.0, %v1506
      %v1508 = vpop.f32.mrf.mxu0
      %v1509 = vpop.f32.mrf.mxu0
      %v1510 = vadd.f32 0.0, %v1509
      %v1511 = vpop.f32.mrf.mxu0
      %1512 = vmatprep.mubr.bf16.mxu0 %v1165
      %1513 = vmatmul.mubr.bf16.gmra.mxu0 %v1164
      %v1514 = vpop.f32.mrf.mxu0
      %v1515 = vadd.f32 0.0, %v1514
      %v1516 = vpop.f32.mrf.mxu0
      %v1517 = vpop.f32.mrf.mxu0
      %v1518 = vadd.f32 0.0, %v1517
      %v1519 = vpop.f32.mrf.mxu0
      %1520 = vdwg.mxu0
      %1521 = vmatprep.subr.bf16.mxu0 0
      %1522 = vmatpush1.bf16.msra.mxu0 %v1383
      %1523 = vmatprep.subr.bf16.mxu0 0
      %1524 = vmatpush1.bf16.msra.mxu0 %v1382
      %1525 = vmatprep.subr.bf16.mxu0 0
      %1526 = vmatpush1.bf16.msra.mxu0 %v1381
      %1527 = vmatprep.subr.bf16.mxu0 0
      %1528 = vmatpush1.bf16.msra.mxu0 %v1380
      %1529 = vmatprep.subr.bf16.mxu0 0
      %1530 = vmatpush1.bf16.msra.mxu0 %v1379
      %1531 = vmatprep.subr.bf16.mxu0 0
      %1532 = vmatpush1.bf16.msra.mxu0 %v1378
      %1533 = vmatprep.subr.bf16.mxu0 0
      %1534 = vmatpush1.bf16.msra.mxu0 %v1377
      %1535 = vmatprep.subr.bf16.mxu0 0
      %1536 = vmatpush1.bf16.msra.mxu0 %v1376
      %1537 = vmatprep.subr.bf16.mxu0 0
      %1538 = vmatpush2.bf16.msra.mxu0 %v1391
      %1539 = vmatprep.subr.bf16.mxu0 0
      %1540 = vmatpush2.bf16.msra.mxu0 %v1390
      %1541 = vmatprep.subr.bf16.mxu0 0
      %1542 = vmatpush2.bf16.msra.mxu0 %v1389
      %1543 = vmatprep.subr.bf16.mxu0 0
      %1544 = vmatpush2.bf16.msra.mxu0 %v1388
      %1545 = vmatprep.subr.bf16.mxu0 0
      %1546 = vmatpush2.bf16.msra.mxu0 %v1387
      %1547 = vmatprep.subr.bf16.mxu0 0
      %1548 = vmatpush2.bf16.msra.mxu0 %v1386
      %1549 = vmatprep.subr.bf16.mxu0 0
      %1550 = vmatpush2.bf16.msra.mxu0 %v1385
      %1551 = vmatprep.subr.bf16.mxu0 0
      %1552 = vmatpush2.bf16.msra.mxu0 %v1384
      %1553 = vmatprep.mubr.bf16.mxu0 %v1139
      %1554 = vmatmul.mubr.bf16.gmra.mxu0 %v1138
      %v1555 = vpop.f32.mrf.mxu0
      %v1556 = vadd.f32 %v1459, %v1555
      %v1557 = vpop.f32.mrf.mxu0
      %v1558 = vpop.f32.mrf.mxu0
      %v1559 = vadd.f32 %v1462, %v1558
      %v1560 = vpop.f32.mrf.mxu0
      %1561 = vmatprep.mubr.bf16.mxu0 %v1143
      %1562 = vmatmul.mubr.bf16.gmra.mxu0 %v1142
      %v1563 = vpop.f32.mrf.mxu0
      %v1564 = vadd.f32 %v1467, %v1563
      %v1565 = vpop.f32.mrf.mxu0
      %v1566 = vpop.f32.mrf.mxu0
      %v1567 = vadd.f32 %v1470, %v1566
      %v1568 = vpop.f32.mrf.mxu0
      %1569 = vmatprep.mubr.bf16.mxu0 %v1147
      %1570 = vmatmul.mubr.bf16.gmra.mxu0 %v1146
      %v1571 = vpop.f32.mrf.mxu0
      %v1572 = vadd.f32 %v1475, %v1571
      %v1573 = vpop.f32.mrf.mxu0
      %v1574 = vpop.f32.mrf.mxu0
      %v1575 = vadd.f32 %v1478, %v1574
      %v1576 = vpop.f32.mrf.mxu0
      %1577 = vmatprep.mubr.bf16.mxu0 %v1151
      %1578 = vmatmul.mubr.bf16.gmra.mxu0 %v1150
      %v1579 = vpop.f32.mrf.mxu0
      %v1580 = vadd.f32 %v1483, %v1579
      %v1581 = vpop.f32.mrf.mxu0
      %v1582 = vpop.f32.mrf.mxu0
      %v1583 = vadd.f32 %v1486, %v1582
      %v1584 = vpop.f32.mrf.mxu0
      %1585 = vmatprep.mubr.bf16.mxu0 %v1155
      %1586 = vmatmul.mubr.bf16.gmra.mxu0 %v1154
      %v1587 = vpop.f32.mrf.mxu0
      %v1588 = vadd.f32 %v1491, %v1587
      %v1589 = vpop.f32.mrf.mxu0
      %v1590 = vpop.f32.mrf.mxu0
      %v1591 = vadd.f32 %v1494, %v1590
      %v1592 = vpop.f32.mrf.mxu0
      %1593 = vmatprep.mubr.bf16.mxu0 %v1159
      %1594 = vmatmul.mubr.bf16.gmra.mxu0 %v1158
      %v1595 = vpop.f32.mrf.mxu0
      %v1596 = vadd.f32 %v1499, %v1595
      %v1597 = vpop.f32.mrf.mxu0
      %v1598 = vpop.f32.mrf.mxu0
      %v1599 = vadd.f32 %v1502, %v1598
      %v1600 = vpop.f32.mrf.mxu0
      %1601 = vmatprep.mubr.bf16.mxu0 %v1163
      %1602 = vmatmul.mubr.bf16.gmra.mxu0 %v1162
      %v1603 = vpop.f32.mrf.mxu0
      %v1604 = vadd.f32 %v1507, %v1603
      %v1605 = vpop.f32.mrf.mxu0
      %v1606 = vpop.f32.mrf.mxu0
      %v1607 = vadd.f32 %v1510, %v1606
      %v1608 = vpop.f32.mrf.mxu0
      %1609 = vmatprep.mubr.bf16.mxu0 %v1167
      %1610 = vmatmul.mubr.bf16.gmra.mxu0 %v1166
      %v1611 = vpop.f32.mrf.mxu0
      %v1612 = vadd.f32 %v1515, %v1611
      %v1613 = vpop.f32.mrf.mxu0
      %v1614 = vpop.f32.mrf.mxu0
      %v1615 = vadd.f32 %v1518, %v1614
      %v1616 = vpop.f32.mrf.mxu0
      %1617 = vdwg.mxu0
      %v1618 = vld [vmem:[%s6] sm:$0x1]
      %v1620 = vlaneseq
      %v1621 = vshrl.u32 %v1620, 7
      %v1622 = vsub.s32 0, %v1621
      %v1623 = vrot.slane %v1618, %v1622
      %v1625 = vmul.f32 %v1556, %v1623
      %v1626 = vmul.f32 %v1559, %v1623
      %v1627 = vmul.f32 %v1564, %v1623
      %v1628 = vmul.f32 %v1567, %v1623
      %v1629 = vmul.f32 %v1572, %v1623
      %v1630 = vmul.f32 %v1575, %v1623
      %v1631 = vmul.f32 %v1580, %v1623
      %v1632 = vmul.f32 %v1583, %v1623
      %v1633 = vmul.f32 %v1588, %v1623
      %v1634 = vmul.f32 %v1591, %v1623
      %v1635 = vmul.f32 %v1596, %v1623
      %v1636 = vmul.f32 %v1599, %v1623
      %v1637 = vmul.f32 %v1604, %v1623
      %v1638 = vmul.f32 %v1607, %v1623
      %v1639 = vmul.f32 %v1612, %v1623
      %v1640 = vmul.f32 %v1615, %v1623
      %v1641 = vld [vmem:[%s7] sm:$0x1]
      %v1643 = vlaneseq
      %v1644 = vshrl.u32 %v1643, 7
      %v1645 = vsub.s32 0, %v1644
      %v1646 = vrot.slane %v1641, %v1645
      %v1648 = vadd.f32 %v1625, %v1646
      %v1649 = vadd.f32 %v1626, %v1646
      %v1650 = vadd.f32 %v1627, %v1646
      %v1651 = vadd.f32 %v1628, %v1646
      %v1652 = vadd.f32 %v1629, %v1646
      %v1653 = vadd.f32 %v1630, %v1646
      %v1654 = vadd.f32 %v1631, %v1646
      %v1655 = vadd.f32 %v1632, %v1646
      %v1656 = vadd.f32 %v1633, %v1646
      %v1657 = vadd.f32 %v1634, %v1646
      %v1658 = vadd.f32 %v1635, %v1646
      %v1659 = vadd.f32 %v1636, %v1646
      %v1660 = vadd.f32 %v1637, %v1646
      %v1661 = vadd.f32 %v1638, %v1646
      %v1662 = vadd.f32 %v1639, %v1646
      %v1663 = vadd.f32 %v1640, %v1646
      %v1664 = vmax.f32 %v1648, 0.0
      %v1665 = vmax.f32 %v1649, 0.0
      %v1666 = vmax.f32 %v1650, 0.0
      %v1667 = vmax.f32 %v1651, 0.0
      %v1668 = vmax.f32 %v1652, 0.0
      %v1669 = vmax.f32 %v1653, 0.0
      %v1670 = vmax.f32 %v1654, 0.0
      %v1671 = vmax.f32 %v1655, 0.0
      %v1672 = vmax.f32 %v1656, 0.0
      %v1673 = vmax.f32 %v1657, 0.0
      %v1674 = vmax.f32 %v1658, 0.0
      %v1675 = vmax.f32 %v1659, 0.0
      %v1676 = vmax.f32 %v1660, 0.0
      %v1677 = vmax.f32 %v1661, 0.0
      %v1678 = vmax.f32 %v1662, 0.0
      %v1679 = vmax.f32 %v1663, 0.0
      %v1680 = vpack.c.bf16 %v1665, %v1664
      %v1681 = vpack.c.bf16 %v1667, %v1666
      %v1682 = vpack.c.bf16 %v1669, %v1668
      %v1683 = vpack.c.bf16 %v1671, %v1670
      %v1684 = vpack.c.bf16 %v1673, %v1672
      %v1685 = vpack.c.bf16 %v1675, %v1674
      %v1686 = vpack.c.bf16 %v1677, %v1676
      %v1687 = vpack.c.bf16 %v1679, %v1678
      %v1688 = vld [vmem:[#allocation12] sm:$0xf]
      %v1689 = vld [vmem:[#allocation12 + $0x4] sm:$0xf]
      %v1690 = vld [vmem:[#allocation12 + $0x8] sm:$0xf]
      %v1691 = vld [vmem:[#allocation12 + $0xc] sm:$0xf]
      %v1692 = vld [vmem:[#allocation12 + $0x10] sm:$0xf]
      %v1693 = vld [vmem:[#allocation12 + $0x14] sm:$0xf]
      %v1694 = vld [vmem:[#allocation12 + $0x18] sm:$0xf]
      %v1695 = vld [vmem:[#allocation12 + $0x1c] sm:$0xf]
      %v1696 = vld [vmem:[#allocation12 + $0x20] sm:$0xf]
      %v1697 = vld [vmem:[#allocation12 + $0x24] sm:$0xf]
      %v1698 = vld [vmem:[#allocation12 + $0x28] sm:$0xf]
      %v1699 = vld [vmem:[#allocation12 + $0x2c] sm:$0xf]
      %v1700 = vld [vmem:[#allocation12 + $0x30] sm:$0xf]
      %v1701 = vld [vmem:[#allocation12 + $0x34] sm:$0xf]
      %v1702 = vld [vmem:[#allocation12 + $0x38] sm:$0xf]
      %v1703 = vld [vmem:[#allocation12 + $0x3c] sm:$0xf]
      %v1720 = vunpack.c.l.b16 %v1688
      %v1721 = vunpack.c.l.b16 %v1689
      %v1722 = vunpack.c.l.b16 %v1690
      %v1723 = vunpack.c.l.b16 %v1691
      %v1724 = vunpack.c.l.b16 %v1692
      %v1725 = vunpack.c.l.b16 %v1693
      %v1726 = vunpack.c.l.b16 %v1694
      %v1727 = vunpack.c.l.b16 %v1695
      %v1728 = vunpack.c.l.b16 %v1696
      %v1729 = vunpack.c.l.b16 %v1697
      %v1730 = vunpack.c.l.b16 %v1698
      %v1731 = vunpack.c.l.b16 %v1699
      %v1732 = vunpack.c.l.b16 %v1700
      %v1733 = vunpack.c.l.b16 %v1701
      %v1734 = vunpack.c.l.b16 %v1702
      %v1735 = vunpack.c.l.b16 %v1703
      %v1736 = vpack.c.b16 %v1721, %v1720
      %v1737 = vpack.c.b16 %v1723, %v1722
      %v1738 = vpack.c.b16 %v1725, %v1724
      %v1739 = vpack.c.b16 %v1727, %v1726
      %v1740 = vpack.c.b16 %v1729, %v1728
      %v1741 = vpack.c.b16 %v1731, %v1730
      %v1742 = vpack.c.b16 %v1733, %v1732
      %v1743 = vpack.c.b16 %v1735, %v1734
      %1752 = vmatprep.subr.bf16.mxu0 0
      %1753 = vmatpush1.bf16.msra.mxu0 %v1743
      %1754 = vmatprep.subr.bf16.mxu0 0
      %1755 = vmatpush1.bf16.msra.mxu0 %v1742
      %1756 = vmatprep.subr.bf16.mxu0 0
      %1757 = vmatpush1.bf16.msra.mxu0 %v1741
      %1758 = vmatprep.subr.bf16.mxu0 0
      %1759 = vmatpush1.bf16.msra.mxu0 %v1740
      %1760 = vmatprep.subr.bf16.mxu0 0
      %1761 = vmatpush1.bf16.msra.mxu0 %v1739
      %1762 = vmatprep.subr.bf16.mxu0 0
      %1763 = vmatpush1.bf16.msra.mxu0 %v1738
      %1764 = vmatprep.subr.bf16.mxu0 0
      %1765 = vmatpush1.bf16.msra.mxu0 %v1737
      %1766 = vmatprep.subr.bf16.mxu0 0
      %1767 = vmatpush1.bf16.msra.mxu0 %v1736
      %1768 = vmatprep.subr.bf16.mxu0 0
      %1769 = vmatpush2.bf16.msra.mxu0 0
      %1770 = vmatprep.subr.bf16.mxu0 0
      %1771 = vmatpush2.bf16.msra.mxu0 0
      %1772 = vmatprep.subr.bf16.mxu0 0
      %1773 = vmatpush2.bf16.msra.mxu0 0
      %1774 = vmatprep.subr.bf16.mxu0 0
      %1775 = vmatpush2.bf16.msra.mxu0 0
      %1776 = vmatprep.subr.bf16.mxu0 0
      %1777 = vmatpush2.bf16.msra.mxu0 0
      %1778 = vmatprep.subr.bf16.mxu0 0
      %1779 = vmatpush2.bf16.msra.mxu0 0
      %1780 = vmatprep.subr.bf16.mxu0 0
      %1781 = vmatpush2.bf16.msra.mxu0 0
      %1782 = vmatprep.subr.bf16.mxu0 0
      %1783 = vmatpush2.bf16.msra.mxu0 0
      %1784 = vmatprep.mubr.bf16.mxu0 0
      %1785 = vmatmul.mubr.bf16.gmra.mxu0 %v1680
      %v1786 = vpop.f32.mrf.mxu0
      %v1787 = vadd.f32 0.0, %v1786
      %v1788 = vpop.f32.mrf.mxu0
      %v1789 = vpop.f32.mrf.mxu0
      %v1790 = vadd.f32 0.0, %v1789
      %v1791 = vpop.f32.mrf.mxu0
      %1792 = vmatprep.mubr.bf16.mxu0 0
      %1793 = vmatmul.mubr.bf16.gmra.mxu0 %v1681
      %v1794 = vpop.f32.mrf.mxu0
      %v1795 = vadd.f32 0.0, %v1794
      %v1796 = vpop.f32.mrf.mxu0
      %v1797 = vpop.f32.mrf.mxu0
      %v1798 = vadd.f32 0.0, %v1797
      %v1799 = vpop.f32.mrf.mxu0
      %1800 = vmatprep.mubr.bf16.mxu0 0
      %1801 = vmatmul.mubr.bf16.gmra.mxu0 %v1682
      %v1802 = vpop.f32.mrf.mxu0
      %v1803 = vadd.f32 0.0, %v1802
      %v1804 = vpop.f32.mrf.mxu0
      %v1805 = vpop.f32.mrf.mxu0
      %v1806 = vadd.f32 0.0, %v1805
      %v1807 = vpop.f32.mrf.mxu0
      %1808 = vmatprep.mubr.bf16.mxu0 0
      %1809 = vmatmul.mubr.bf16.gmra.mxu0 %v1683
      %v1810 = vpop.f32.mrf.mxu0
      %v1811 = vadd.f32 0.0, %v1810
      %v1812 = vpop.f32.mrf.mxu0
      %v1813 = vpop.f32.mrf.mxu0
      %v1814 = vadd.f32 0.0, %v1813
      %v1815 = vpop.f32.mrf.mxu0
      %1816 = vmatprep.mubr.bf16.mxu0 0
      %1817 = vmatmul.mubr.bf16.gmra.mxu0 %v1684
      %v1818 = vpop.f32.mrf.mxu0
      %v1819 = vadd.f32 0.0, %v1818
      %v1820 = vpop.f32.mrf.mxu0
      %v1821 = vpop.f32.mrf.mxu0
      %v1822 = vadd.f32 0.0, %v1821
      %v1823 = vpop.f32.mrf.mxu0
      %1824 = vmatprep.mubr.bf16.mxu0 0
      %1825 = vmatmul.mubr.bf16.gmra.mxu0 %v1685
      %v1826 = vpop.f32.mrf.mxu0
      %v1827 = vadd.f32 0.0, %v1826
      %v1828 = vpop.f32.mrf.mxu0
      %v1829 = vpop.f32.mrf.mxu0
      %v1830 = vadd.f32 0.0, %v1829
      %v1831 = vpop.f32.mrf.mxu0
      %1832 = vmatprep.mubr.bf16.mxu0 0
      %1833 = vmatmul.mubr.bf16.gmra.mxu0 %v1686
      %v1834 = vpop.f32.mrf.mxu0
      %v1835 = vadd.f32 0.0, %v1834
      %v1836 = vpop.f32.mrf.mxu0
      %v1837 = vpop.f32.mrf.mxu0
      %v1838 = vadd.f32 0.0, %v1837
      %v1839 = vpop.f32.mrf.mxu0
      %1840 = vmatprep.mubr.bf16.mxu0 0
      %1841 = vmatmul.mubr.bf16.gmra.mxu0 %v1687
      %v1842 = vpop.f32.mrf.mxu0
      %v1843 = vadd.f32 0.0, %v1842
      %v1844 = vpop.f32.mrf.mxu0
      %v1845 = vpop.f32.mrf.mxu0
      %v1846 = vadd.f32 0.0, %v1845
      %v1847 = vpop.f32.mrf.mxu0
      %1848 = vdwg.mxu0
      %v1849 = vmul.f32 %v325, %v1787
      %v1850 = vmul.f32 %v330, %v1790
      %v1851 = vmul.f32 %v335, %v1795
      %v1852 = vmul.f32 %v340, %v1798
      %v1853 = vmul.f32 %v345, %v1803
      %v1854 = vmul.f32 %v350, %v1806
      %v1855 = vmul.f32 %v355, %v1811
      %v1856 = vmul.f32 %v360, %v1814
      %v1857 = vmul.f32 %v365, %v1819
      %v1858 = vmul.f32 %v370, %v1822
      %v1859 = vmul.f32 %v375, %v1827
      %v1860 = vmul.f32 %v380, %v1830
      %v1861 = vmul.f32 %v385, %v1835
      %v1862 = vmul.f32 %v390, %v1838
      %v1863 = vmul.f32 %v395, %v1843
      %v1864 = vmul.f32 %v400, %v1846
      %v1865 = vpack.c.bf16 %v1850, %v1849
      %v1866 = vpack.c.bf16 %v1852, %v1851
      %v1867 = vpack.c.bf16 %v1854, %v1853
      %v1868 = vpack.c.bf16 %v1856, %v1855
      %v1869 = vpack.c.bf16 %v1858, %v1857
      %v1870 = vpack.c.bf16 %v1860, %v1859
      %v1871 = vpack.c.bf16 %v1862, %v1861
      %v1872 = vpack.c.bf16 %v1864, %v1863
      %v1881 = vunpack.c.l.b16 %v1865
      %v1882 = vunpack.c.h.b16 %v1865
      %v1883 = vunpack.c.l.b16 %v1866
      %v1884 = vunpack.c.h.b16 %v1866
      %v1885 = vunpack.c.l.b16 %v1867
      %v1886 = vunpack.c.h.b16 %v1867
      %v1887 = vunpack.c.l.b16 %v1868
      %v1888 = vunpack.c.h.b16 %v1868
      %v1889 = vunpack.c.l.b16 %v1869
      %v1890 = vunpack.c.h.b16 %v1869
      %v1891 = vunpack.c.l.b16 %v1870
      %v1892 = vunpack.c.h.b16 %v1870
      %v1893 = vunpack.c.l.b16 %v1871
      %v1894 = vunpack.c.h.b16 %v1871
      %v1895 = vunpack.c.l.b16 %v1872
      %v1896 = vunpack.c.h.b16 %v1872
      %v1897 = vpack.c.b16 %v1881, %v1881
      %v1898 = vpack.c.b16 %v1882, %v1882
      %v1899 = vpack.c.b16 %v1883, %v1883
      %v1900 = vpack.c.b16 %v1884, %v1884
      %v1901 = vpack.c.b16 %v1885, %v1885
      %v1902 = vpack.c.b16 %v1886, %v1886
      %v1903 = vpack.c.b16 %v1887, %v1887
      %v1904 = vpack.c.b16 %v1888, %v1888
      %v1905 = vpack.c.b16 %v1889, %v1889
      %v1906 = vpack.c.b16 %v1890, %v1890
      %v1907 = vpack.c.b16 %v1891, %v1891
      %v1908 = vpack.c.b16 %v1892, %v1892
      %v1909 = vpack.c.b16 %v1893, %v1893
      %v1910 = vpack.c.b16 %v1894, %v1894
      %v1911 = vpack.c.b16 %v1895, %v1895
      %v1912 = vpack.c.b16 %v1896, %v1896
      %1929 = vst [vmem:[#allocation15] sm:$0xf] %v1897
      %1930 = vst [vmem:[#allocation15 + $0x4] sm:$0xf] %v1898
      %1931 = vst [vmem:[#allocation15 + $0x8] sm:$0xf] %v1899
      %1932 = vst [vmem:[#allocation15 + $0xc] sm:$0xf] %v1900
      %1933 = vst [vmem:[#allocation15 + $0x10] sm:$0xf] %v1901
      %1934 = vst [vmem:[#allocation15 + $0x14] sm:$0xf] %v1902
      %1935 = vst [vmem:[#allocation15 + $0x18] sm:$0xf] %v1903
      %1936 = vst [vmem:[#allocation15 + $0x1c] sm:$0xf] %v1904
      %1937 = vst [vmem:[#allocation15 + $0x20] sm:$0xf] %v1905
      %1938 = vst [vmem:[#allocation15 + $0x24] sm:$0xf] %v1906
      %1939 = vst [vmem:[#allocation15 + $0x28] sm:$0xf] %v1907
      %1940 = vst [vmem:[#allocation15 + $0x2c] sm:$0xf] %v1908
      %1941 = vst [vmem:[#allocation15 + $0x30] sm:$0xf] %v1909
      %1942 = vst [vmem:[#allocation15 + $0x34] sm:$0xf] %v1910
      %1943 = vst [vmem:[#allocation15 + $0x38] sm:$0xf] %v1911
      %1944 = vst [vmem:[#allocation15 + $0x3c] sm:$0xf] %v1912
    $region69: #{tpu_custom_call.1} parent=1 // pred_fallthru
      _
    // Predicated region
    $region70: #{tpu_custom_call.1} parent=1 // pred_check
      _
    $region71: #{tpu_custom_call.1} parent=1 // pred_check_branch
      %1946 = sbr.rel (0) target = $region73
    $region72: #{tpu_custom_call.1} parent=1 // pred_region
      %s1948 = ssub.s32 2048, 2048
      %1949 = vsyncadd [#allocation5], %s1948
      %s1950 = sshll.u32 [#allocation14], 4
      %s1951 = int_to_ptr.vmem [resolvable:$true] %s1950
      %1956 = dma.vmem_to_hbm [thread:$0]  %s1951, 2048, %s9, [#allocation5], 128, 128, 8
    $region73: #{tpu_custom_call.1} parent=1 // pred_fallthru
      _
    // Predicated region
    $region74: #{tpu_custom_call.1} parent=1 // pred_check
      _
    $region75: #{tpu_custom_call.1} parent=1 // pred_check_branch
      %1958 = sbr.rel (0) target = $region77
    $region76: #{tpu_custom_call.1} parent=1 // pred_region
      %s1960 = ssub.s32 1024, 1024
      %1961 = vsyncadd [#allocation16], %s1960
      %s1962 = sshll.u32 [#allocation15], 4
      %s1963 = int_to_ptr.vmem [resolvable:$true] %s1962
      %1968 = dma.vmem_to_hbm [thread:$0]  %s1963, 1024, %s10, [#allocation16], 64, 64, 4
    $region77: #{tpu_custom_call.1} parent=1 // pred_fallthru
      _
    // Predicated region
    $region78: #{tpu_custom_call.1} parent=1 // pred_check
      _
    $region79: #{tpu_custom_call.1} parent=1 // pred_check_branch
      %1970 = sbr.rel (0) target = $region81
    $region80: #{tpu_custom_call.1} parent=1 // pred_region
      %1971 = dma.done [#allocation5], 2048
    $region81: #{tpu_custom_call.1} parent=1 // pred_fallthru
      _
    // Predicated region
    $region82: #{tpu_custom_call.1} parent=1 // pred_check
      _
    $region83: #{tpu_custom_call.1} parent=1 // pred_check_branch
      %1973 = sbr.rel (0) target = $region85
    $region84: #{tpu_custom_call.1} parent=1 // pred_region
      %1974 = dma.done [#allocation16], 1024
    $region85: #{tpu_custom_call.1} parent=1 // pred_fallthru
      _
    %1975 = vsyncpa [#allocation4], 1
    %1976 = vsyncpa [#allocation7], 1
    %1977 = vsyncpa [#allocation10], 1
    %1978 = vsyncpa [#allocation13], 1
    %1979 = vsyncpa [#allocation5], 1
    %1980 = vsyncpa [#allocation16], 1

</llo_original>
